<compile_context>
chip_gen: v7x
topology: tpu7x:2x2x1
jax: 0.10.0
libtpu: 0.0.40
codegen_flags: <defaults>
</compile_context>

<pallas_src>
import functools
import math

import numpy as np
import jax
import jax.numpy as jnp
from jax.experimental import pallas as pl
from jax.experimental.pallas import tpu as pltpu

# ----- hyperparameters from Audio2Mel.__init__ defaults -----
N_FFT = 512
HOP_LENGTH = 256                 # == N_FFT // 2 (50% overlap) -> enables chunked framing
WIN_LENGTH = N_FFT               # see TODO(synk) above
SAMPLING_RATE = 16000
N_MEL = 80
MEL_PAD = 128                    # mel output padded to a full lane tile (sliced to 80 outside)
MEL_FMIN = 90.0
MEL_FMAX = 7600.0
MIN_MEL = math.log(1e-5)
N_BINS = N_FFT // 2              # onesided bins minus the (zero-mel-weight) Nyquist bin

assert 2 * HOP_LENGTH == N_FFT, "chunked framing assumes 50% frame overlap"


# ----- deterministic parameter construction (librosa-style Slaney mel basis) -----
def _hz_to_mel(f):
    f = np.asarray(f, dtype=np.float64)
    f_sp = 200.0 / 3
    mels = f / f_sp
    min_log_hz = 1000.0
    min_log_mel = min_log_hz / f_sp
    logstep = np.log(6.4) / 27.0
    return np.where(f >= min_log_hz,
                    min_log_mel + np.log(np.maximum(f, 1e-10) / min_log_hz) / logstep,
                    mels)


def _mel_to_hz(m):
    m = np.asarray(m, dtype=np.float64)
    f_sp = 200.0 / 3
    freqs = m * f_sp
    min_log_hz = 1000.0
    min_log_mel = min_log_hz / f_sp
    logstep = np.log(6.4) / 27.0
    return np.where(m >= min_log_mel,
                    min_log_hz * np.exp(logstep * (m - min_log_mel)),
                    freqs)


def mel_filterbank(sr, n_fft, n_mels, fmin, fmax):
    n_freq = n_fft // 2 + 1
    fftfreqs = np.linspace(0.0, sr / 2.0, n_freq)
    mel_pts = _mel_to_hz(np.linspace(_hz_to_mel(fmin), _hz_to_mel(fmax), n_mels + 2))
    fdiff = np.diff(mel_pts)
    ramps = mel_pts[:, None] - fftfreqs[None, :]
    lower = -ramps[:-2] / fdiff[:-1, None]
    upper = ramps[2:] / fdiff[1:, None]
    weights = np.maximum(0.0, np.minimum(lower, upper))
    enorm = 2.0 / (mel_pts[2:n_mels + 2] - mel_pts[:n_mels])
    weights = weights * enorm[:, None]
    return weights.astype(np.float32)   # (n_mels, n_freq)


def _round_up(x, m):
    return (x + m - 1) // m * m


@functools.lru_cache(maxsize=1)
def _constants():
    # periodic Hann window (torch.hann_window default), win_length == n_fft
    n = np.arange(N_FFT, dtype=np.float64)
    window = 0.5 * (1.0 - np.cos(2.0 * np.pi * n / N_FFT))

    # real-DFT bases: X[k] = sum_n x[n] cos(2*pi*k*n/N) - i * sum_n x[n] sin(2*pi*k*n/N)
    # Nyquist bin (k = 256) dropped: its mel weight is exactly 0 since fmax = 7600 < 8000.
    kk = np.arange(N_BINS, dtype=np.float64)
    ang = 2.0 * np.pi * np.outer(n, kk) / N_FFT                     # (n_fft, n_bins)
    fused = np.concatenate([np.cos(ang), -np.sin(ang)], axis=1)     # (n_fft, 2*n_bins)
    fused *= window[:, None]                                        # fold Hann window in
    # bf16 weights: MXU runs at native rate, f32 accumulation keeps the sums accurate
    basis_top = jnp.asarray(fused[:HOP_LENGTH], dtype=jnp.bfloat16)  # rows for chunk i
    basis_bot = jnp.asarray(fused[HOP_LENGTH:], dtype=jnp.bfloat16)  # rows for chunk i+1

    mel_b = mel_filterbank(SAMPLING_RATE, N_FFT, N_MEL, MEL_FMIN, MEL_FMAX)  # (80, 257)
    mel_t = np.zeros((N_BINS, MEL_PAD), dtype=np.float32)           # pad 80 -> 128 lanes
    mel_t[:, :N_MEL] = mel_b[:, :N_BINS].T
    return basis_top, basis_bot, jnp.asarray(mel_t, dtype=jnp.bfloat16)


# ----- Pallas kernel: fused windowed DFT, magnitude, mel, log, normalize -----
def _make_kernel(transpose_out):
    def kernel(lo_ref, hi_ref, btop_ref, bbot_ref, melb_ref, out_ref):
        # lo[i] = first half of frame i, hi[i] = second half (next hop chunk).
        lo = lo_ref[...].astype(jnp.bfloat16)                       # (tf, HOP)
        hi = hi_ref[...].astype(jnp.bfloat16)                       # (tf, HOP)

        # windowed real-DFT; Hann folded into bases; columns = [cos(256) | -sin(256)]
        dft = (jnp.dot(lo, btop_ref[...], preferred_element_type=jnp.float32)
               + jnp.dot(hi, bbot_ref[...], preferred_element_type=jnp.float32))
        real = dft[:, :N_BINS]
        imag = dft[:, N_BINS:]
        mag = jnp.sqrt(real * real + imag * imag)                   # (tf, N_BINS) f32

        mel = jnp.dot(mag.astype(jnp.bfloat16), melb_ref[...],
                      preferred_element_type=jnp.float32)           # (tf, MEL_PAD)
        norm = (jnp.log(jnp.maximum(mel, 1e-5)) - MIN_MEL) / (-MIN_MEL)
        if transpose_out:
            out_ref[...] = norm.T                                   # (MEL_PAD, tf), XLU
        else:
            out_ref[...] = norm                                     # (tf, MEL_PAD)
        # NOTE: the PyTorch forward also computes min/max/mean/std of log_mel_spec but
        # never uses them on the normalize=True return path, so they are omitted.
    return kernel


def audio2mel(audio, tile_frames=512):
    """audio: (B, 1, T) float32  ->  (B, N_MEL, n_frames) float32."""
    assert audio.ndim == 3 and audio.shape[1] == 1
    B = audio.shape[0]
    p = (N_FFT - HOP_LENGTH) // 2
    x = jnp.pad(audio, ((0, 0), (0, 0), (p, p)), mode="reflect")[:, 0, :]   # (B, T + 2p)
    t_padded = x.shape[-1]
    n_frames = (t_padded - N_FFT) // HOP_LENGTH + 1
    assert n_frames >= 1

    # frame-axis tiling: derive tf from the real frame count so per-tile padding < 8 frames
    n_tiles = max(1, pl.cdiv(n_frames, tile_frames))
    tf = _round_up(pl.cdiv(n_frames, n_tiles), 8)
    n_frames_pad = n_tiles * tf

    # chunks of hop_length samples; frame i = [chunk i | chunk i+1]; the 1-chunk offset
    # for the second half is applied by the DMA (second input), not by an in-kernel copy.
    needed = (n_frames_pad + 1) * HOP_LENGTH
    if needed > t_padded:
        x = jnp.pad(x, ((0, 0), (0, needed - t_padded)))
    lo_chunks = x[:, :n_frames_pad * HOP_LENGTH].reshape(B, n_frames_pad, HOP_LENGTH)
    hi_chunks = x[:, HOP_LENGTH:needed].reshape(B, n_frames_pad, HOP_LENGTH)

    basis_top, basis_bot, mel_basis_t = _constants()

    # Fuse the (n_mel, frames) output layout into the kernel when the frame tile is a
    # full lane multiple; otherwise keep frame-major stores lane-dense and swap outside.
    transpose_out = (tf % 128 == 0)
    if transpose_out:
        out_shape = jax.ShapeDtypeStruct((B, MEL_PAD, n_frames_pad), jnp.float32)
        out_spec = pl.BlockSpec((None, MEL_PAD, tf), lambda b, f: (b, 0, f))
    else:
        out_shape = jax.ShapeDtypeStruct((B, n_frames_pad, MEL_PAD), jnp.float32)
        out_spec = pl.BlockSpec((None, tf, MEL_PAD), lambda b, f: (b, f, 0))

    out = pl.pallas_call(
        _make_kernel(transpose_out),
        out_shape=out_shape,
        grid=(B, n_tiles),
        in_specs=[
            pl.BlockSpec((None, tf, HOP_LENGTH), lambda b, f: (b, f, 0)),
            pl.BlockSpec((None, tf, HOP_LENGTH), lambda b, f: (b, f, 0)),
            pl.BlockSpec((HOP_LENGTH, 2 * N_BINS), lambda b, f: (0, 0)),
            pl.BlockSpec((HOP_LENGTH, 2 * N_BINS), lambda b, f: (0, 0)),
            pl.BlockSpec((N_BINS, MEL_PAD), lambda b, f: (0, 0)),
        ],
        out_specs=out_spec,
        compiler_params=pltpu.CompilerParams(
            dimension_semantics=("parallel", "parallel")),
    )(lo_chunks, hi_chunks, basis_top, basis_bot, mel_basis_t)

    if transpose_out:
        return out[:, :N_MEL, :n_frames]          # (B, n_mel_channels, n_frames)
    out = out[:, :n_frames, :N_MEL]               # drop frame-tile and mel-lane padding
    return jnp.swapaxes(out, 1, 2)


# ----- pure-JAX reference (full 257-bin STFT, explicit window, f32 HIGHEST matmuls) -----
def _reference(audio):
    p = (N_FFT - HOP_LENGTH) // 2
    x = jnp.pad(audio, ((0, 0), (0, 0), (p, p)), mode="reflect")[:, 0, :]
    n_frames = (x.shape[-1] - N_FFT) // HOP_LENGTH + 1
    idx = HOP_LENGTH * jnp.arange(n_frames)[:, None] + jnp.arange(N_FFT)[None, :]
    frames = x[:, idx]                                              # (B, n_frames, n_fft)

    n = np.arange(N_FFT, dtype=np.float64)
    window = 0.5 * (1.0 - np.cos(2.0 * np.pi * n / N_FFT))
    kk = np.arange(N_FFT // 2 + 1, dtype=np.float64)
    ang = 2.0 * np.pi * np.outer(n, kk) / N_FFT
    cos_b = jnp.asarray(np.cos(ang), jnp.float32)
    sin_b = jnp.asarray(-np.sin(ang), jnp.float32)
    fw = frames * jnp.asarray(window, jnp.float32)
    hi = jax.lax.Precision.HIGHEST
    real = jnp.einsum("btn,nk->btk", fw, cos_b, precision=hi)
    imag = jnp.einsum("btn,nk->btk", fw, sin_b, precision=hi)
    mag = jnp.sqrt(real * real + imag * imag)
    mel_b = jnp.asarray(mel_filterbank(SAMPLING_RATE, N_FFT, N_MEL, MEL_FMIN, MEL_FMAX))
    mel = jnp.einsum("btk,mk->btm", mag, mel_b, precision=hi)
    log_mel = jnp.log(jnp.maximum(mel, 1e-5))
    return jnp.swapaxes((log_mel - MIN_MEL) / (-MIN_MEL), 1, 2)


def _check(audio, tile_frames):
    mel_spec = jax.block_until_ready(audio2mel(audio, tile_frames=tile_frames))
    B, _, T = audio.shape
    p = (N_FFT - HOP_LENGTH) // 2
    expected_frames = (T + 2 * p - N_FFT) // HOP_LENGTH + 1
    assert mel_spec.shape == (B, N_MEL, expected_frames), mel_spec.shape
    assert mel_spec.dtype == jnp.float32
    assert bool(jnp.all(jnp.isfinite(mel_spec)))
    ref = jax.block_until_ready(_reference(audio))
    max_err = float(jnp.max(jnp.abs(mel_spec - ref)))
    # bf16 matmul operands vs f32-HIGHEST reference: error is compressed by log + /11.5
    assert bool(jnp.allclose(mel_spec, ref, atol=2e-2, rtol=2e-2)), max_err


if __name__ == "__main__":
    key = jax.random.PRNGKey(0)

    # case 1: short audio -> single small tile, frame-major (fallback) output layout
    audio_small = 0.1 * jax.random.normal(key, (2, 1, 4096), dtype=jnp.float32)
    _check(audio_small, tile_frames=512)

    # case 2: longer audio -> multiple frame tiles, fused in-kernel transposed output
    audio_long = 0.1 * jax.random.normal(key, (2, 1, 65536), dtype=jnp.float32)
    _check(audio_long, tile_frames=128)

    print("KERNEL_OK")
</pallas_src>

<mosaic_0001>
module attributes {stable_mosaic.version = 11 : i64} {
  func.func @kernel(%arg0: i32, %arg1: i32, %arg2: memref<1x16x256xf32, #tpu.memory_space<vmem>>, %arg3: memref<1x16x256xf32, #tpu.memory_space<vmem>>, %arg4: memref<256x512xbf16, #tpu.memory_space<vmem>>, %arg5: memref<256x512xbf16, #tpu.memory_space<vmem>>, %arg6: memref<256x128xbf16, #tpu.memory_space<vmem>>, %arg7: memref<1x16x128xf32, #tpu.memory_space<vmem>>) attributes {dimension_semantics = [#tpu.dimension_semantics<parallel>, #tpu.dimension_semantics<parallel>], iteration_bounds = array<i64: 2, 1>, scalar_prefetch = 0 : i64, scratch_operands = 0 : i64, tpu.core_type = #tpu.core_type<tc>, window_params = [{transform_indices = @transform_0, window_bounds = array<i64: 1, 16, 256>}, {transform_indices = @transform_1, window_bounds = array<i64: 1, 16, 256>}, {pipeline_mode = #tpu.pipeline_mode<synchronous>, transform_indices = @transform_2, window_bounds = array<i64: 256, 512>}, {pipeline_mode = #tpu.pipeline_mode<synchronous>, transform_indices = @transform_3, window_bounds = array<i64: 256, 512>}, {pipeline_mode = #tpu.pipeline_mode<synchronous>, transform_indices = @transform_4, window_bounds = array<i64: 256, 128>}, {transform_indices = @transform_5, window_bounds = array<i64: 1, 16, 128>}]} {
    %c0 = arith.constant 0 : index
    %c0_0 = arith.constant 0 : index
    %c0_1 = arith.constant 0 : index
    %0 = vector.load %arg2[%c0, %c0_0, %c0_1] : memref<1x16x256xf32, #tpu.memory_space<vmem>>, vector<1x16x256xf32>
    %1 = vector.shape_cast %0 : vector<1x16x256xf32> to vector<16x256xf32>
    %2 = arith.truncf %1 : vector<16x256xf32> to vector<16x256xbf16>
    %c0_2 = arith.constant 0 : index
    %c0_3 = arith.constant 0 : index
    %c0_4 = arith.constant 0 : index
    %3 = vector.load %arg3[%c0_2, %c0_3, %c0_4] : memref<1x16x256xf32, #tpu.memory_space<vmem>>, vector<1x16x256xf32>
    %4 = vector.shape_cast %3 : vector<1x16x256xf32> to vector<16x256xf32>
    %5 = arith.truncf %4 : vector<16x256xf32> to vector<16x256xbf16>
    %c0_5 = arith.constant 0 : index
    %c0_6 = arith.constant 0 : index
    %6 = vector.load %arg4[%c0_5, %c0_6] : memref<256x512xbf16, #tpu.memory_space<vmem>>, vector<256x512xbf16>
    %cst = arith.constant dense<0.000000e+00> : vector<16x512xf32>
    %7 = tpu.matmul %2, %6, %cst {dimension_numbers = #tpu.dot_dimension_numbers<[1], [0], [0], [1], [0, 0, 1, 1], [], []>} : vector<16x256xbf16>, vector<256x512xbf16>, vector<16x512xf32> -> vector<16x512xf32>
    %c0_7 = arith.constant 0 : index
    %c0_8 = arith.constant 0 : index
    %8 = vector.load %arg5[%c0_7, %c0_8] : memref<256x512xbf16, #tpu.memory_space<vmem>>, vector<256x512xbf16>
    %cst_9 = arith.constant dense<0.000000e+00> : vector<16x512xf32>
    %9 = tpu.matmul %5, %8, %cst_9 {dimension_numbers = #tpu.dot_dimension_numbers<[1], [0], [0], [1], [0, 0, 1, 1], [], []>} : vector<16x256xbf16>, vector<256x512xbf16>, vector<16x512xf32> -> vector<16x512xf32>
    %10 = arith.addf %7, %9 : vector<16x512xf32>
    %11 = vector.extract_strided_slice %10 {offsets = [0, 0], sizes = [16, 256], strides = [1, 1]} : vector<16x512xf32> to vector<16x256xf32>
    %12 = vector.extract_strided_slice %10 {offsets = [0, 256], sizes = [16, 256], strides = [1, 1]} : vector<16x512xf32> to vector<16x256xf32>
    %13 = arith.mulf %11, %11 : vector<16x256xf32>
    %14 = arith.mulf %12, %12 : vector<16x256xf32>
    %15 = arith.addf %13, %14 : vector<16x256xf32>
    %16 = math.sqrt %15 : vector<16x256xf32>
    %17 = arith.truncf %16 : vector<16x256xf32> to vector<16x256xbf16>
    %c0_10 = arith.constant 0 : index
    %c0_11 = arith.constant 0 : index
    %18 = vector.load %arg6[%c0_10, %c0_11] : memref<256x128xbf16, #tpu.memory_space<vmem>>, vector<256x128xbf16>
    %cst_12 = arith.constant dense<0.000000e+00> : vector<16x128xf32>
    %19 = tpu.matmul %17, %18, %cst_12 {dimension_numbers = #tpu.dot_dimension_numbers<[1], [0], [0], [1], [0, 0, 1, 1], [], []>} : vector<16x256xbf16>, vector<256x128xbf16>, vector<16x128xf32> -> vector<16x128xf32>
    %cst_13 = arith.constant 9.99999974E-6 : f32
    %20 = vector.broadcast %cst_13 : f32 to vector<16x128xf32>
    %21 = arith.maximumf %19, %20 : vector<16x128xf32>
    %22 = math.log %21 : vector<16x128xf32>
    %cst_14 = arith.constant -11.5129251 : f32
    %23 = vector.broadcast %cst_14 : f32 to vector<16x128xf32>
    %24 = arith.subf %22, %23 : vector<16x128xf32>
    %cst_15 = arith.constant 11.5129251 : f32
    %25 = vector.broadcast %cst_15 : f32 to vector<16x128xf32>
    %26 = arith.divf %24, %25 : vector<16x128xf32>
    %c0_16 = arith.constant 0 : index
    %c0_17 = arith.constant 0 : index
    %c0_18 = arith.constant 0 : index
    %27 = vector.load %arg7[%c0_16, %c0_17, %c0_18] : memref<1x16x128xf32, #tpu.memory_space<vmem>>, vector<1x16x128xf32>
    %28 = vector.shape_cast %27 : vector<1x16x128xf32> to vector<16x128xf32>
    %29 = vector.shape_cast %26 : vector<16x128xf32> to vector<1x16x128xf32>
    tpu.vector_store %arg7[%c0_16, %c0_17, %c0_18], %29 {strides = array<i32>} : memref<1x16x128xf32, #tpu.memory_space<vmem>>, vector<1x16x128xf32>,
    return
  }
  func.func @transform_0(%arg0: i32, %arg1: i32) -> (i32, i32, i32) {
    %c0_i32 = arith.constant 0 : i32
    %c0_i32_0 = arith.constant 0 : i32
    return %arg0, %arg1, %c0_i32 : i32, i32, i32
  }
  func.func @transform_1(%arg0: i32, %arg1: i32) -> (i32, i32, i32) {
    %c0_i32 = arith.constant 0 : i32
    %c0_i32_0 = arith.constant 0 : i32
    return %arg0, %arg1, %c0_i32 : i32, i32, i32
  }
  func.func @transform_2(%arg0: i32, %arg1: i32) -> (i32, i32) {
    %c0_i32 = arith.constant 0 : i32
    %c0_i32_0 = arith.constant 0 : i32
    %c0_i32_1 = arith.constant 0 : i32
    return %c0_i32, %c0_i32_0 : i32, i32
  }
  func.func @transform_3(%arg0: i32, %arg1: i32) -> (i32, i32) {
    %c0_i32 = arith.constant 0 : i32
    %c0_i32_0 = arith.constant 0 : i32
    %c0_i32_1 = arith.constant 0 : i32
    return %c0_i32, %c0_i32_0 : i32, i32
  }
  func.func @transform_4(%arg0: i32, %arg1: i32) -> (i32, i32) {
    %c0_i32 = arith.constant 0 : i32
    %c0_i32_0 = arith.constant 0 : i32
    %c0_i32_1 = arith.constant 0 : i32
    return %c0_i32, %c0_i32_0 : i32, i32
  }
  func.func @transform_5(%arg0: i32, %arg1: i32) -> (i32, i32, i32) {
    %c0_i32 = arith.constant 0 : i32
    %c0_i32_0 = arith.constant 0 : i32
    return %arg0, %arg1, %c0_i32 : i32, i32, i32
  }
}

</mosaic_0001>

<llo_original>
// kernel: tpu_custom_call.1
$region0: #{tpu_custom_call.1}
  #allocation0 [shape = 'u32[]', space=smem, size = 0x4, offset = 0x4, fixed_abs, tag = 'smem constant byte address 0x4 - core index']
  #allocation1 [shape = 'u32[144,128]{1,0:T(1,128)}', space=vmem, size = 0x12000, scoped, tag = 'internal scratch']
  %s0 = inlined_call_operand.hbm [shape: f32[2,16,256], index: 0, kind: input, shape index: {}]
  %s1 = inlined_call_operand.hbm [shape: f32[2,16,256], index: 1, kind: input, shape index: {}]
  %s2 = inlined_call_operand.hbm [shape: bf16[256,512], index: 2, kind: input, shape index: {}]
  %s3 = inlined_call_operand.hbm [shape: bf16[256,512], index: 3, kind: input, shape index: {}]
  %s4 = inlined_call_operand.hbm [shape: bf16[256,128], index: 4, kind: input, shape index: {}]
  %s5 = inlined_call_operand.hbm [shape: f32[2,16,128], index: 5, kind: output, shape index: {}]
  %s6 = sld [smem:[#allocation0]]
  $region73: #{tpu_custom_call.1} parent=0
    _
  %s8 = ssub.s32 1, %s6
  %s9 = scalar_select 0, %s8, %s6
  $region1: #{tpu_custom_call.1} parent=0
    #allocation2 [shape = 'u8[32768]{0}', space=vmem, size = 0x8000, scoped, tag = 'input window, operand 0']
    #allocation3 [shape = 's32[2]{0}', space=sflag, size = 0x8, scoped, tag = 'scoped memory for tpu_custom_call.1']
    #allocation4 [shape = 's32[2]{0}', space=sflag, size = 0x8, scoped, tag = 'scoped memory for tpu_custom_call.1']
    #allocation5 [shape = 'u8[32768]{0}', space=vmem, size = 0x8000, scoped, tag = 'input window, operand 1']
    #allocation6 [shape = 's32[2]{0}', space=sflag, size = 0x8, scoped, tag = 'scoped memory for tpu_custom_call.1']
    #allocation7 [shape = 'u8[262144]{0}', space=vmem, size = 0x40000, scoped, tag = 'input window, operand 2, single buffered']
    #allocation8 [shape = 'u8[262144]{0}', space=vmem, size = 0x40000, scoped, tag = 'input window, operand 3, single buffered']
    #allocation9 [shape = 's32[1]{0}', space=sflag, size = 0x4, scoped, tag = 'scoped memory for tpu_custom_call.1']
    #allocation10 [shape = 'u8[65536]{0}', space=vmem, size = 0x10000, scoped, tag = 'input window, operand 4, single buffered']
    #allocation11 [shape = 'u8[16384]{0}', space=vmem, size = 0x4000, scoped, tag = 'output window, operand 0']
    %10 = vsyncpa [#allocation3], 0
    %s11 = scalar_lea.sflag [#allocation3], 1
    %12 = vsyncpa %s11, 0
    %13 = vsyncpa [#allocation6], 0
    %s14 = scalar_lea.sflag [#allocation6], 1
    %15 = vsyncpa %s14, 0
    %16 = vsyncpa [#allocation9], 0
    %17 = vsyncpa [#allocation4], 0
    %s18 = scalar_lea.sflag [#allocation4], 1
    %19 = vsyncpa %s18, 0
    loop: start=0, step=1, limit=4
    $region2: #{tpu_custom_call.1} parent=1 // loop_pre_header
      _
    $region3: #{tpu_custom_call.1} parent=1 // loop_header
      %s21 = sphi 0, %s25
      %p22 = scmp.ge.s32.totalorder %s21, 4
      %s28 = sphi 0, %s40
      %s29 = sphi 0, %s36
      %s30 = sphi 0, %s28
      %s31 = sphi 0, %s29
      %s32 = sphi 0, %s30
      %s33 = sphi 0, %s31
      %s45 = sphi 0, %s47
      %s48 = sphi 0, %s45
      %s49 = sphi 0, %s48
      %s65 = sphi 0, %s49
      %s73 = sphi 0, %s75
      %s76 = sphi 0, %s73
      %s77 = sphi 0, %s76
      %s93 = sphi 0, %s77
      %s97 = sphi 0, %s97
      %s99 = sphi 0, %s97
      %s100 = sphi 0, %s99
      %s114 = sphi 0, %s100
      %s118 = sphi 0, %s118
      %s120 = sphi 0, %s118
      %s121 = sphi 0, %s120
      %s135 = sphi 0, %s121
      %s139 = sphi 0, %s139
      %s141 = sphi 0, %s139
      %s142 = sphi 0, %s141
      %s156 = sphi 0, %s142
      %s164 = sphi 0, %s166
      %s167 = sphi 0, %s164
      %s168 = sphi 0, %s167
      %s184 = sphi 0, %s168
    $region4: #{tpu_custom_call.1} parent=1 // loop_header_branch
      %24 = sbr.rel (%p22) target = $region8
    $region5: #{tpu_custom_call.1} parent=1 // loop_body
      %s26 = ssub.s32 %s21, 1
      %s27 = ssub.s32 %s21, 2
      %s34 = sadd.s32 1, %s29
      %p35 = scmp.ge.s32.totalorder %s34, 1
      %s36 = scalar_select %p35, 0, %s34
      %s37 = sadd.s32 1, %s28
      %s38 = scalar_select %p35, %s37, %s28
      %p39 = scmp.ge.s32.totalorder %s38, 2
      %s40 = scalar_select %p39, 0, %s38
      %s41 = ssub.s32 %s28, %s40
      %s42 = ssub.s32 %s29, %s36
      %s43 = sor.u32 %s41, %s42
      %p44 = scmp.eq.s32.totalorder %s43, 0
      %s46 = sadd.s32 %s45, 1
      %s47 = scalar_select %p44, %s45, %s46
      %p50 = pneg %p44
      %p51 = scmp.eq.s32.totalorder %s21, 1
      %p52 = por %p50, %p51
      %p53 = scmp.ne.s32.totalorder %s45, %s48
      %p54 = scmp.eq.s32.totalorder %s21, 0
      %p55 = por %p53, %p54
      %p56 = scmp.ne.s32.totalorder %s45, %s48
      %p57 = scmp.eq.s32.totalorder %s26, 1
      %p58 = por %p56, %p57
      %p59 = scmp.ne.s32.totalorder %s48, %s49
      %p60 = scmp.eq.s32.totalorder %s26, 0
      %p61 = por %p59, %p60
      %p62 = scmp.ne.s32.totalorder %s48, %s49
      %p63 = scmp.eq.s32.totalorder %s27, 1
      %p64 = por %p62, %p63
      %p66 = scmp.ne.s32.totalorder %s49, %s65
      %p67 = scmp.eq.s32.totalorder %s27, 0
      %p68 = por %p66, %p67
      %s69 = ssub.s32 %s28, %s40
      %s70 = ssub.s32 %s29, %s36
      %s71 = sor.u32 %s69, %s70
      %p72 = scmp.eq.s32.totalorder %s71, 0
      %s74 = sadd.s32 %s73, 1
      %s75 = scalar_select %p72, %s73, %s74
      %p78 = pneg %p72
      %p79 = scmp.eq.s32.totalorder %s21, 1
      %p80 = por %p78, %p79
      %p81 = scmp.ne.s32.totalorder %s73, %s76
      %p82 = scmp.eq.s32.totalorder %s21, 0
      %p83 = por %p81, %p82
      %p84 = scmp.ne.s32.totalorder %s73, %s76
      %p85 = scmp.eq.s32.totalorder %s26, 1
      %p86 = por %p84, %p85
      %p87 = scmp.ne.s32.totalorder %s76, %s77
      %p88 = scmp.eq.s32.totalorder %s26, 0
      %p89 = por %p87, %p88
      %p90 = scmp.ne.s32.totalorder %s76, %s77
      %p91 = scmp.eq.s32.totalorder %s27, 1
      %p92 = por %p90, %p91
      %p94 = scmp.ne.s32.totalorder %s77, %s93
      %p95 = scmp.eq.s32.totalorder %s27, 0
      %p96 = por %p94, %p95
      %s98 = sadd.s32 %s97, 1
      %p101 = scmp.eq.s32.totalorder %s21, 1
      %p102 = scmp.ne.s32.totalorder %s97, %s99
      %p103 = scmp.eq.s32.totalorder %s21, 0
      %p104 = por %p102, %p103
      %p105 = scmp.ne.s32.totalorder %s97, %s99
      %p106 = scmp.eq.s32.totalorder %s26, 1
      %p107 = por %p105, %p106
      %p108 = scmp.ne.s32.totalorder %s99, %s100
      %p109 = scmp.eq.s32.totalorder %s26, 0
      %p110 = por %p108, %p109
      %p111 = scmp.ne.s32.totalorder %s99, %s100
      %p112 = scmp.eq.s32.totalorder %s27, 1
      %p113 = por %p111, %p112
      %p115 = scmp.ne.s32.totalorder %s100, %s114
      %p116 = scmp.eq.s32.totalorder %s27, 0
      %p117 = por %p115, %p116
      %s119 = sadd.s32 %s118, 1
      %p122 = scmp.eq.s32.totalorder %s21, 1
      %p123 = scmp.ne.s32.totalorder %s118, %s120
      %p124 = scmp.eq.s32.totalorder %s21, 0
      %p125 = por %p123, %p124
      %p126 = scmp.ne.s32.totalorder %s118, %s120
      %p127 = scmp.eq.s32.totalorder %s26, 1
      %p128 = por %p126, %p127
      %p129 = scmp.ne.s32.totalorder %s120, %s121
      %p130 = scmp.eq.s32.totalorder %s26, 0
      %p131 = por %p129, %p130
      %p132 = scmp.ne.s32.totalorder %s120, %s121
      %p133 = scmp.eq.s32.totalorder %s27, 1
      %p134 = por %p132, %p133
      %p136 = scmp.ne.s32.totalorder %s121, %s135
      %p137 = scmp.eq.s32.totalorder %s27, 0
      %p138 = por %p136, %p137
      %s140 = sadd.s32 %s139, 1
      %p143 = scmp.eq.s32.totalorder %s21, 1
      %p144 = scmp.ne.s32.totalorder %s139, %s141
      %p145 = scmp.eq.s32.totalorder %s21, 0
      %p146 = por %p144, %p145
      %p147 = scmp.ne.s32.totalorder %s139, %s141
      %p148 = scmp.eq.s32.totalorder %s26, 1
      %p149 = por %p147, %p148
      %p150 = scmp.ne.s32.totalorder %s141, %s142
      %p151 = scmp.eq.s32.totalorder %s26, 0
      %p152 = por %p150, %p151
      %p153 = scmp.ne.s32.totalorder %s141, %s142
      %p154 = scmp.eq.s32.totalorder %s27, 1
      %p155 = por %p153, %p154
      %p157 = scmp.ne.s32.totalorder %s142, %s156
      %p158 = scmp.eq.s32.totalorder %s27, 0
      %p159 = por %p157, %p158
      %s160 = ssub.s32 %s28, %s40
      %s161 = ssub.s32 %s29, %s36
      %s162 = sor.u32 %s160, %s161
      %p163 = scmp.eq.s32.totalorder %s162, 0
      %s165 = sadd.s32 %s164, 1
      %s166 = scalar_select %p163, %s164, %s165
      %p169 = pneg %p163
      %p170 = scmp.eq.s32.totalorder %s21, 1
      %p171 = por %p169, %p170
      %p172 = scmp.ne.s32.totalorder %s164, %s167
      %p173 = scmp.eq.s32.totalorder %s21, 0
      %p174 = por %p172, %p173
      %p175 = scmp.ne.s32.totalorder %s164, %s167
      %p176 = scmp.eq.s32.totalorder %s26, 1
      %p177 = por %p175, %p176
      %p178 = scmp.ne.s32.totalorder %s167, %s168
      %p179 = scmp.eq.s32.totalorder %s26, 0
      %p180 = por %p178, %p179
      %p181 = scmp.ne.s32.totalorder %s167, %s168
      %p182 = scmp.eq.s32.totalorder %s27, 1
      %p183 = por %p181, %p182
      %p185 = scmp.ne.s32.totalorder %s168, %s184
      %p186 = scmp.eq.s32.totalorder %s27, 0
      %p187 = por %p185, %p186
      %p188 = scmp.le.s32.totalorder 1, %s21
      %p189 = scmp.lt.s32.totalorder %s21, 3
      %p190 = pnand %p188, %p189
      %p191 = pneg %p190
      // Predicated region
      $region9: #{tpu_custom_call.1} parent=5 // pred_check
        _
      $region10: #{tpu_custom_call.1} parent=5 // pred_check_branch
        %193 = sbr.rel (%p190) target = $region12
      $region11: #{tpu_custom_call.1} parent=5 // pred_region
        %s194 = ssub.s32 %s21, 1
        // Predicated region
        $region13: #{tpu_custom_call.1} parent=11 // pred_check
          %p195 = pneg %p110
        $region14: #{tpu_custom_call.1} parent=11 // pred_check_branch
          %197 = sbr.rel (%p195) target = $region16
        $region15: #{tpu_custom_call.1} parent=11 // pred_region
          %s199 = ssub.s32 8192, 8192
          %200 = vsyncadd [#allocation6], %s199
          %s201 = sshll.u32 [#allocation7], 4
          %s202 = int_to_ptr.vmem [resolvable:$true] %s201
          %207 = dma.hbm_to_vmem [thread:$0]  %s2, 8192, %s202, [#allocation6], 256, 256, 16
        $region16: #{tpu_custom_call.1} parent=11 // pred_fallthru
          _
        // Predicated region
        $region17: #{tpu_custom_call.1} parent=11 // pred_check
          %p208 = pneg %p131
        $region18: #{tpu_custom_call.1} parent=11 // pred_check_branch
          %210 = sbr.rel (%p208) target = $region20
        $region19: #{tpu_custom_call.1} parent=11 // pred_region
          %s212 = ssub.s32 8192, 8192
          %213 = vsyncadd [#allocation9], %s212
          %s214 = sshll.u32 [#allocation8], 4
          %s215 = int_to_ptr.vmem [resolvable:$true] %s214
          %220 = dma.hbm_to_vmem [thread:$0]  %s3, 8192, %s215, [#allocation9], 256, 256, 16
        $region20: #{tpu_custom_call.1} parent=11 // pred_fallthru
          _
        // Predicated region
        $region21: #{tpu_custom_call.1} parent=11 // pred_check
          %p221 = pneg %p152
        $region22: #{tpu_custom_call.1} parent=11 // pred_check_branch
          %223 = sbr.rel (%p221) target = $region24
        $region23: #{tpu_custom_call.1} parent=11 // pred_region
          %s225 = ssub.s32 2048, 2048
          %226 = vsyncadd [#allocation9], %s225
          %s227 = sshll.u32 [#allocation10], 4
          %s228 = int_to_ptr.vmem [resolvable:$true] %s227
          %233 = dma.hbm_to_vmem [thread:$0]  %s4, 2048, %s228, [#allocation9], 64, 64, 4
        $region24: #{tpu_custom_call.1} parent=11 // pred_fallthru
          _
      $region12: #{tpu_custom_call.1} parent=5 // pred_fallthru
        _
      %p234 = scmp.lt.s32.totalorder %s21, 2
      // Predicated region
      $region25: #{tpu_custom_call.1} parent=5 // pred_check
        %p235 = pneg %p234
      $region26: #{tpu_custom_call.1} parent=5 // pred_check_branch
        %237 = sbr.rel (%p235) target = $region28
      $region27: #{tpu_custom_call.1} parent=5 // pred_region
        // Predicated region
        $region29: #{tpu_custom_call.1} parent=27 // pred_check
          %p238 = pneg %p55
        $region30: #{tpu_custom_call.1} parent=27 // pred_check_branch
          %240 = sbr.rel (%p238) target = $region32
        $region31: #{tpu_custom_call.1} parent=27 // pred_region
          %s241 = sand.u32 %s45, 1
          %s242 = scalar_lea.sflag [#allocation3], %s241
          %s243 = sand.u32 %s45, 1
          %s244 = smul.addr %s243, 32
          %s245 = scalar_lea.vmem [#allocation2], %s244
          %s246 = smul.u32 2, %s29
          %s248 = ssub.s32 512, 512
          %249 = vsyncadd %s242, %s248
          %s250 = smul.addr %s246, 2
          %s251 = smul.addr %s28, 4
          %s252 = sadd.s32 %s250, %s251
          %s253 = smul.addr %s252, 128
          %s254 = scalar_lea.hbm %s0, %s253
          %s255 = sshll.u32 %s245, 4
          %s256 = int_to_ptr.vmem [resolvable:$true] %s255
          %261 = dma.hbm_to_vmem [thread:$0]  %s254, 512, %s256, %s242, 256, 256, 16
        $region32: #{tpu_custom_call.1} parent=27 // pred_fallthru
          _
        // Predicated region
        $region33: #{tpu_custom_call.1} parent=27 // pred_check
          %p262 = pneg %p83
        $region34: #{tpu_custom_call.1} parent=27 // pred_check_branch
          %264 = sbr.rel (%p262) target = $region36
        $region35: #{tpu_custom_call.1} parent=27 // pred_region
          %s265 = sand.u32 %s21, 1
          %s266 = scalar_lea.sflag [#allocation6], %s265
          %s267 = sand.u32 %s73, 1
          %s268 = smul.addr %s267, 32
          %s269 = scalar_lea.vmem [#allocation5], %s268
          %s270 = smul.u32 2, %s29
          %s272 = ssub.s32 512, 512
          %273 = vsyncadd %s266, %s272
          %s274 = smul.addr %s270, 2
          %s275 = smul.addr %s28, 4
          %s276 = sadd.s32 %s274, %s275
          %s277 = smul.addr %s276, 128
          %s278 = scalar_lea.hbm %s1, %s277
          %s279 = sshll.u32 %s269, 4
          %s280 = int_to_ptr.vmem [resolvable:$true] %s279
          %285 = dma.hbm_to_vmem [thread:$0]  %s278, 512, %s280, %s266, 256, 256, 16
        $region36: #{tpu_custom_call.1} parent=27 // pred_fallthru
          _
      $region28: #{tpu_custom_call.1} parent=5 // pred_fallthru
        _
      %p286 = scmp.le.s32.totalorder 1, %s21
      %p287 = scmp.lt.s32.totalorder %s21, 3
      %p288 = pnand %p286, %p287
      %p289 = pneg %p288
      // Predicated region
      $region37: #{tpu_custom_call.1} parent=5 // pred_check
        _
      $region38: #{tpu_custom_call.1} parent=5 // pred_check_branch
        %291 = sbr.rel (%p288) target = $region40
      $region39: #{tpu_custom_call.1} parent=5 // pred_region
        %s292 = ssub.s32 %s21, 1
        %s293 = sand.u32 %s48, 1
        %s294 = scalar_lea.sflag [#allocation3], %s293
        %s295 = sand.u32 %s48, 1
        %s296 = smul.addr %s295, 32
        %s297 = scalar_lea.vmem [#allocation2], %s296
        // Predicated region
        $region41: #{tpu_custom_call.1} parent=39 // pred_check
          %p298 = pneg %p61
        $region42: #{tpu_custom_call.1} parent=39 // pred_check_branch
          %300 = sbr.rel (%p298) target = $region44
        $region43: #{tpu_custom_call.1} parent=39 // pred_region
          %301 = dma.done %s294, 512
        $region44: #{tpu_custom_call.1} parent=39 // pred_fallthru
          _
        %s302 = sand.u32 %s26, 1
        %s303 = scalar_lea.sflag [#allocation6], %s302
        %s304 = sand.u32 %s76, 1
        %s305 = smul.addr %s304, 32
        %s306 = scalar_lea.vmem [#allocation5], %s305
        // Predicated region
        $region45: #{tpu_custom_call.1} parent=39 // pred_check
          %p307 = pneg %p89
        $region46: #{tpu_custom_call.1} parent=39 // pred_check_branch
          %309 = sbr.rel (%p307) target = $region48
        $region47: #{tpu_custom_call.1} parent=39 // pred_region
          %310 = dma.done %s303, 512
        $region48: #{tpu_custom_call.1} parent=39 // pred_fallthru
          _
        // Predicated region
        $region49: #{tpu_custom_call.1} parent=39 // pred_check
          %p311 = pneg %p110
        $region50: #{tpu_custom_call.1} parent=39 // pred_check_branch
          %313 = sbr.rel (%p311) target = $region52
        $region51: #{tpu_custom_call.1} parent=39 // pred_region
          %314 = dma.done [#allocation6], 8192
        $region52: #{tpu_custom_call.1} parent=39 // pred_fallthru
          _
        // Predicated region
        $region53: #{tpu_custom_call.1} parent=39 // pred_check
          %p315 = pneg %p131
        $region54: #{tpu_custom_call.1} parent=39 // pred_check_branch
          %317 = sbr.rel (%p315) target = $region56
        $region55: #{tpu_custom_call.1} parent=39 // pred_region
          %318 = dma.done [#allocation9], 8192
        $region56: #{tpu_custom_call.1} parent=39 // pred_fallthru
          _
        // Predicated region
        $region57: #{tpu_custom_call.1} parent=39 // pred_check
          %p319 = pneg %p152
        $region58: #{tpu_custom_call.1} parent=39 // pred_check_branch
          %321 = sbr.rel (%p319) target = $region60
        $region59: #{tpu_custom_call.1} parent=39 // pred_region
          %322 = dma.done [#allocation9], 2048
        $region60: #{tpu_custom_call.1} parent=39 // pred_fallthru
          _
        %s323 = sand.u32 %s48, 1
        %s324 = scalar_lea.sflag [#allocation3], %s323
        %s325 = sand.u32 %s48, 1
        %s326 = smul.addr %s325, 32
        %s327 = scalar_lea.vmem [#allocation2], %s326
        %p328 = pneg %p61
        %p329 = pneg %p58
        %s330 = sand.u32 %s26, 1
        %s331 = scalar_lea.sflag [#allocation6], %s330
        %s332 = sand.u32 %s76, 1
        %s333 = smul.addr %s332, 32
        %s334 = scalar_lea.vmem [#allocation5], %s333
        %p335 = pneg %p89
        %p336 = pneg %p86
        %p337 = pneg %p110
        %p338 = pneg %p107
        %p339 = pneg %p131
        %p340 = pneg %p128
        %p341 = pneg %p152
        %p342 = pneg %p149
        %p343 = pneg %p180
        %p344 = pneg %p177
        %s345 = sand.u32 %s167, 1
        %s346 = scalar_lea.sflag [#allocation4], %s345
        %s347 = sand.u32 %s167, 1
        %s348 = smul.addr %s347, 16
        %s349 = scalar_lea.vmem [#allocation11], %s348
        %s350 = smul.u32 2, %s31
        %s351 = smul.u32 2, %s31
        %s352 = smul.u32 2, %s31
        %v354 = vld [vmem:[%s297] sm:$0xff]
        %v355 = vld [vmem:[%s297 + $0x8] sm:$0xff]
        %v356 = vld [vmem:[%s297 + $0x10] sm:$0xff]
        %v357 = vld [vmem:[%s297 + $0x18] sm:$0xff]
        %v358 = vpack.c.bf16 %v356, %v354
        %v359 = vpack.c.bf16 %v357, %v355
        %v360 = vld [vmem:[%s306] sm:$0xff]
        %v361 = vld [vmem:[%s306 + $0x8] sm:$0xff]
        %v362 = vld [vmem:[%s306 + $0x10] sm:$0xff]
        %v363 = vld [vmem:[%s306 + $0x18] sm:$0xff]
        %v364 = vpack.c.bf16 %v362, %v360
        %v365 = vpack.c.bf16 %v363, %v361
        %v366 = vld [vmem:[#allocation7] sm:$0xff]
        %v367 = vld [vmem:[#allocation7 + $0x8] sm:$0xff]
        %v368 = vld [vmem:[#allocation7 + $0x10] sm:$0xff]
        %v369 = vld [vmem:[#allocation7 + $0x18] sm:$0xff]
        %v370 = vld [vmem:[#allocation7 + $0x20] sm:$0xff]
        %v371 = vld [vmem:[#allocation7 + $0x28] sm:$0xff]
        %v372 = vld [vmem:[#allocation7 + $0x30] sm:$0xff]
        %v373 = vld [vmem:[#allocation7 + $0x38] sm:$0xff]
        %v374 = vld [vmem:[#allocation7 + $0x40] sm:$0xff]
        %v375 = vld [vmem:[#allocation7 + $0x48] sm:$0xff]
        %v376 = vld [vmem:[#allocation7 + $0x50] sm:$0xff]
        %v377 = vld [vmem:[#allocation7 + $0x58] sm:$0xff]
        %v378 = vld [vmem:[#allocation7 + $0x60] sm:$0xff]
        %v379 = vld [vmem:[#allocation7 + $0x68] sm:$0xff]
        %v380 = vld [vmem:[#allocation7 + $0x70] sm:$0xff]
        %v381 = vld [vmem:[#allocation7 + $0x78] sm:$0xff]
        %v382 = vld [vmem:[#allocation7 + $0x80] sm:$0xff]
        %v383 = vld [vmem:[#allocation7 + $0x88] sm:$0xff]
        %v384 = vld [vmem:[#allocation7 + $0x90] sm:$0xff]
        %v385 = vld [vmem:[#allocation7 + $0x98] sm:$0xff]
        %v386 = vld [vmem:[#allocation7 + $0xa0] sm:$0xff]
        %v387 = vld [vmem:[#allocation7 + $0xa8] sm:$0xff]
        %v388 = vld [vmem:[#allocation7 + $0xb0] sm:$0xff]
        %v389 = vld [vmem:[#allocation7 + $0xb8] sm:$0xff]
        %v390 = vld [vmem:[#allocation7 + $0xc0] sm:$0xff]
        %v391 = vld [vmem:[#allocation7 + $0xc8] sm:$0xff]
        %v392 = vld [vmem:[#allocation7 + $0xd0] sm:$0xff]
        %v393 = vld [vmem:[#allocation7 + $0xd8] sm:$0xff]
        %v394 = vld [vmem:[#allocation7 + $0xe0] sm:$0xff]
        %v395 = vld [vmem:[#allocation7 + $0xe8] sm:$0xff]
        %v396 = vld [vmem:[#allocation7 + $0xf0] sm:$0xff]
        %v397 = vld [vmem:[#allocation7 + $0xf8] sm:$0xff]
        %v398 = vld [vmem:[#allocation7 + $0x100] sm:$0xff]
        %v399 = vld [vmem:[#allocation7 + $0x108] sm:$0xff]
        %v400 = vld [vmem:[#allocation7 + $0x110] sm:$0xff]
        %v401 = vld [vmem:[#allocation7 + $0x118] sm:$0xff]
        %v402 = vld [vmem:[#allocation7 + $0x120] sm:$0xff]
        %v403 = vld [vmem:[#allocation7 + $0x128] sm:$0xff]
        %v404 = vld [vmem:[#allocation7 + $0x130] sm:$0xff]
        %v405 = vld [vmem:[#allocation7 + $0x138] sm:$0xff]
        %v406 = vld [vmem:[#allocation7 + $0x140] sm:$0xff]
        %v407 = vld [vmem:[#allocation7 + $0x148] sm:$0xff]
        %v408 = vld [vmem:[#allocation7 + $0x150] sm:$0xff]
        %v409 = vld [vmem:[#allocation7 + $0x158] sm:$0xff]
        %v410 = vld [vmem:[#allocation7 + $0x160] sm:$0xff]
        %v411 = vld [vmem:[#allocation7 + $0x168] sm:$0xff]
        %v412 = vld [vmem:[#allocation7 + $0x170] sm:$0xff]
        %v413 = vld [vmem:[#allocation7 + $0x178] sm:$0xff]
        %v414 = vld [vmem:[#allocation7 + $0x180] sm:$0xff]
        %v415 = vld [vmem:[#allocation7 + $0x188] sm:$0xff]
        %v416 = vld [vmem:[#allocation7 + $0x190] sm:$0xff]
        %v417 = vld [vmem:[#allocation7 + $0x198] sm:$0xff]
        %v418 = vld [vmem:[#allocation7 + $0x1a0] sm:$0xff]
        %v419 = vld [vmem:[#allocation7 + $0x1a8] sm:$0xff]
        %v420 = vld [vmem:[#allocation7 + $0x1b0] sm:$0xff]
        %v421 = vld [vmem:[#allocation7 + $0x1b8] sm:$0xff]
        %v422 = vld [vmem:[#allocation7 + $0x1c0] sm:$0xff]
        %v423 = vld [vmem:[#allocation7 + $0x1c8] sm:$0xff]
        %v424 = vld [vmem:[#allocation7 + $0x1d0] sm:$0xff]
        %v425 = vld [vmem:[#allocation7 + $0x1d8] sm:$0xff]
        %v426 = vld [vmem:[#allocation7 + $0x1e0] sm:$0xff]
        %v427 = vld [vmem:[#allocation7 + $0x1e8] sm:$0xff]
        %v428 = vld [vmem:[#allocation7 + $0x1f0] sm:$0xff]
        %v429 = vld [vmem:[#allocation7 + $0x1f8] sm:$0xff]
        %v430 = vld [vmem:[#allocation8] sm:$0xff]
        %v431 = vld [vmem:[#allocation8 + $0x8] sm:$0xff]
        %v432 = vld [vmem:[#allocation8 + $0x10] sm:$0xff]
        %v433 = vld [vmem:[#allocation8 + $0x18] sm:$0xff]
        %v434 = vld [vmem:[#allocation8 + $0x20] sm:$0xff]
        %v435 = vld [vmem:[#allocation8 + $0x28] sm:$0xff]
        %v436 = vld [vmem:[#allocation8 + $0x30] sm:$0xff]
        %v437 = vld [vmem:[#allocation8 + $0x38] sm:$0xff]
        %v438 = vld [vmem:[#allocation8 + $0x40] sm:$0xff]
        %v439 = vld [vmem:[#allocation8 + $0x48] sm:$0xff]
        %v440 = vld [vmem:[#allocation8 + $0x50] sm:$0xff]
        %v441 = vld [vmem:[#allocation8 + $0x58] sm:$0xff]
        %v442 = vld [vmem:[#allocation8 + $0x60] sm:$0xff]
        %v443 = vld [vmem:[#allocation8 + $0x68] sm:$0xff]
        %v444 = vld [vmem:[#allocation8 + $0x70] sm:$0xff]
        %v445 = vld [vmem:[#allocation8 + $0x78] sm:$0xff]
        %v446 = vld [vmem:[#allocation8 + $0x80] sm:$0xff]
        %v447 = vld [vmem:[#allocation8 + $0x88] sm:$0xff]
        %v448 = vld [vmem:[#allocation8 + $0x90] sm:$0xff]
        %v449 = vld [vmem:[#allocation8 + $0x98] sm:$0xff]
        %v450 = vld [vmem:[#allocation8 + $0xa0] sm:$0xff]
        %v451 = vld [vmem:[#allocation8 + $0xa8] sm:$0xff]
        %v452 = vld [vmem:[#allocation8 + $0xb0] sm:$0xff]
        %v453 = vld [vmem:[#allocation8 + $0xb8] sm:$0xff]
        %v454 = vld [vmem:[#allocation8 + $0xc0] sm:$0xff]
        %v455 = vld [vmem:[#allocation8 + $0xc8] sm:$0xff]
        %v456 = vld [vmem:[#allocation8 + $0xd0] sm:$0xff]
        %v457 = vld [vmem:[#allocation8 + $0xd8] sm:$0xff]
        %v458 = vld [vmem:[#allocation8 + $0xe0] sm:$0xff]
        %v459 = vld [vmem:[#allocation8 + $0xe8] sm:$0xff]
        %v460 = vld [vmem:[#allocation8 + $0xf0] sm:$0xff]
        %v461 = vld [vmem:[#allocation8 + $0xf8] sm:$0xff]
        %v462 = vld [vmem:[#allocation8 + $0x100] sm:$0xff]
        %v463 = vld [vmem:[#allocation8 + $0x108] sm:$0xff]
        %v464 = vld [vmem:[#allocation8 + $0x110] sm:$0xff]
        %v465 = vld [vmem:[#allocation8 + $0x118] sm:$0xff]
        %v466 = vld [vmem:[#allocation8 + $0x120] sm:$0xff]
        %v467 = vld [vmem:[#allocation8 + $0x128] sm:$0xff]
        %v468 = vld [vmem:[#allocation8 + $0x130] sm:$0xff]
        %v469 = vld [vmem:[#allocation8 + $0x138] sm:$0xff]
        %v470 = vld [vmem:[#allocation8 + $0x140] sm:$0xff]
        %v471 = vld [vmem:[#allocation8 + $0x148] sm:$0xff]
        %v472 = vld [vmem:[#allocation8 + $0x150] sm:$0xff]
        %v473 = vld [vmem:[#allocation8 + $0x158] sm:$0xff]
        %v474 = vld [vmem:[#allocation8 + $0x160] sm:$0xff]
        %v475 = vld [vmem:[#allocation8 + $0x168] sm:$0xff]
        %v476 = vld [vmem:[#allocation8 + $0x170] sm:$0xff]
        %v477 = vld [vmem:[#allocation8 + $0x178] sm:$0xff]
        %v478 = vld [vmem:[#allocation8 + $0x180] sm:$0xff]
        %v479 = vld [vmem:[#allocation8 + $0x188] sm:$0xff]
        %v480 = vld [vmem:[#allocation8 + $0x190] sm:$0xff]
        %v481 = vld [vmem:[#allocation8 + $0x198] sm:$0xff]
        %v482 = vld [vmem:[#allocation8 + $0x1a0] sm:$0xff]
        %v483 = vld [vmem:[#allocation8 + $0x1a8] sm:$0xff]
        %v484 = vld [vmem:[#allocation8 + $0x1b0] sm:$0xff]
        %v485 = vld [vmem:[#allocation8 + $0x1b8] sm:$0xff]
        %v486 = vld [vmem:[#allocation8 + $0x1c0] sm:$0xff]
        %v487 = vld [vmem:[#allocation8 + $0x1c8] sm:$0xff]
        %v488 = vld [vmem:[#allocation8 + $0x1d0] sm:$0xff]
        %v489 = vld [vmem:[#allocation8 + $0x1d8] sm:$0xff]
        %v490 = vld [vmem:[#allocation8 + $0x1e0] sm:$0xff]
        %v491 = vld [vmem:[#allocation8 + $0x1e8] sm:$0xff]
        %v492 = vld [vmem:[#allocation8 + $0x1f0] sm:$0xff]
        %v493 = vld [vmem:[#allocation8 + $0x1f8] sm:$0xff]
        %v558 = vunpack.c.l.b16 %v430
        %v559 = vunpack.c.h.b16 %v430
        %v560 = vunpack.c.l.b16 %v431
        %v561 = vunpack.c.h.b16 %v431
        %v562 = vunpack.c.l.b16 %v432
        %v563 = vunpack.c.h.b16 %v432
        %v564 = vunpack.c.l.b16 %v433
        %v565 = vunpack.c.h.b16 %v433
        %v566 = vunpack.c.l.b16 %v434
        %v567 = vunpack.c.h.b16 %v434
        %v568 = vunpack.c.l.b16 %v435
        %v569 = vunpack.c.h.b16 %v435
        %v570 = vunpack.c.l.b16 %v436
        %v571 = vunpack.c.h.b16 %v436
        %v572 = vunpack.c.l.b16 %v437
        %v573 = vunpack.c.h.b16 %v437
        %v574 = vunpack.c.l.b16 %v438
        %v575 = vunpack.c.h.b16 %v438
        %v576 = vunpack.c.l.b16 %v439
        %v577 = vunpack.c.h.b16 %v439
        %v578 = vunpack.c.l.b16 %v440
        %v579 = vunpack.c.h.b16 %v440
        %v580 = vunpack.c.l.b16 %v441
        %v581 = vunpack.c.h.b16 %v441
        %v582 = vunpack.c.l.b16 %v442
        %v583 = vunpack.c.h.b16 %v442
        %v584 = vunpack.c.l.b16 %v443
        %v585 = vunpack.c.h.b16 %v443
        %v586 = vunpack.c.l.b16 %v444
        %v587 = vunpack.c.h.b16 %v444
        %v588 = vunpack.c.l.b16 %v445
        %v589 = vunpack.c.h.b16 %v445
        %v590 = vunpack.c.l.b16 %v446
        %v591 = vunpack.c.h.b16 %v446
        %v592 = vunpack.c.l.b16 %v447
        %v593 = vunpack.c.h.b16 %v447
        %v594 = vunpack.c.l.b16 %v448
        %v595 = vunpack.c.h.b16 %v448
        %v596 = vunpack.c.l.b16 %v449
        %v597 = vunpack.c.h.b16 %v449
        %v598 = vunpack.c.l.b16 %v450
        %v599 = vunpack.c.h.b16 %v450
        %v600 = vunpack.c.l.b16 %v451
        %v601 = vunpack.c.h.b16 %v451
        %v602 = vunpack.c.l.b16 %v452
        %v603 = vunpack.c.h.b16 %v452
        %v604 = vunpack.c.l.b16 %v453
        %v605 = vunpack.c.h.b16 %v453
        %v606 = vunpack.c.l.b16 %v454
        %v607 = vunpack.c.h.b16 %v454
        %v608 = vunpack.c.l.b16 %v455
        %v609 = vunpack.c.h.b16 %v455
        %v610 = vunpack.c.l.b16 %v456
        %v611 = vunpack.c.h.b16 %v456
        %v612 = vunpack.c.l.b16 %v457
        %v613 = vunpack.c.h.b16 %v457
        %v614 = vunpack.c.l.b16 %v458
        %v615 = vunpack.c.h.b16 %v458
        %v616 = vunpack.c.l.b16 %v459
        %v617 = vunpack.c.h.b16 %v459
        %v618 = vunpack.c.l.b16 %v460
        %v619 = vunpack.c.h.b16 %v460
        %v620 = vunpack.c.l.b16 %v461
        %v621 = vunpack.c.h.b16 %v461
        %v622 = vunpack.c.l.b16 %v462
        %v623 = vunpack.c.h.b16 %v462
        %v624 = vunpack.c.l.b16 %v463
        %v625 = vunpack.c.h.b16 %v463
        %v626 = vunpack.c.l.b16 %v464
        %v627 = vunpack.c.h.b16 %v464
        %v628 = vunpack.c.l.b16 %v465
        %v629 = vunpack.c.h.b16 %v465
        %v630 = vunpack.c.l.b16 %v466
        %v631 = vunpack.c.h.b16 %v466
        %v632 = vunpack.c.l.b16 %v467
        %v633 = vunpack.c.h.b16 %v467
        %v634 = vunpack.c.l.b16 %v468
        %v635 = vunpack.c.h.b16 %v468
        %v636 = vunpack.c.l.b16 %v469
        %v637 = vunpack.c.h.b16 %v469
        %v638 = vunpack.c.l.b16 %v470
        %v639 = vunpack.c.h.b16 %v470
        %v640 = vunpack.c.l.b16 %v471
        %v641 = vunpack.c.h.b16 %v471
        %v642 = vunpack.c.l.b16 %v472
        %v643 = vunpack.c.h.b16 %v472
        %v644 = vunpack.c.l.b16 %v473
        %v645 = vunpack.c.h.b16 %v473
        %v646 = vunpack.c.l.b16 %v474
        %v647 = vunpack.c.h.b16 %v474
        %v648 = vunpack.c.l.b16 %v475
        %v649 = vunpack.c.h.b16 %v475
        %v650 = vunpack.c.l.b16 %v476
        %v651 = vunpack.c.h.b16 %v476
        %v652 = vunpack.c.l.b16 %v477
        %v653 = vunpack.c.h.b16 %v477
        %v654 = vunpack.c.l.b16 %v478
        %v655 = vunpack.c.h.b16 %v478
        %v656 = vunpack.c.l.b16 %v479
        %v657 = vunpack.c.h.b16 %v479
        %v658 = vunpack.c.l.b16 %v480
        %v659 = vunpack.c.h.b16 %v480
        %v660 = vunpack.c.l.b16 %v481
        %v661 = vunpack.c.h.b16 %v481
        %v662 = vunpack.c.l.b16 %v482
        %v663 = vunpack.c.h.b16 %v482
        %v664 = vunpack.c.l.b16 %v483
        %v665 = vunpack.c.h.b16 %v483
        %v666 = vunpack.c.l.b16 %v484
        %v667 = vunpack.c.h.b16 %v484
        %v668 = vunpack.c.l.b16 %v485
        %v669 = vunpack.c.h.b16 %v485
        %v670 = vunpack.c.l.b16 %v486
        %v671 = vunpack.c.h.b16 %v486
        %v672 = vunpack.c.l.b16 %v487
        %v673 = vunpack.c.h.b16 %v487
        %v674 = vunpack.c.l.b16 %v488
        %v675 = vunpack.c.h.b16 %v488
        %v676 = vunpack.c.l.b16 %v489
        %v677 = vunpack.c.h.b16 %v489
        %v678 = vunpack.c.l.b16 %v490
        %v679 = vunpack.c.h.b16 %v490
        %v680 = vunpack.c.l.b16 %v491
        %v681 = vunpack.c.h.b16 %v491
        %v682 = vunpack.c.l.b16 %v492
        %v683 = vunpack.c.h.b16 %v492
        %v684 = vunpack.c.l.b16 %v493
        %v685 = vunpack.c.h.b16 %v493
        %v686 = vpack.c.b16 %v562, %v558
        %v687 = vpack.c.b16 %v563, %v559
        %v688 = vpack.c.b16 %v564, %v560
        %v689 = vpack.c.b16 %v565, %v561
        %v690 = vpack.c.b16 %v570, %v566
        %v691 = vpack.c.b16 %v571, %v567
        %v692 = vpack.c.b16 %v572, %v568
        %v693 = vpack.c.b16 %v573, %v569
        %v694 = vpack.c.b16 %v578, %v574
        %v695 = vpack.c.b16 %v579, %v575
        %v696 = vpack.c.b16 %v580, %v576
        %v697 = vpack.c.b16 %v581, %v577
        %v698 = vpack.c.b16 %v586, %v582
        %v699 = vpack.c.b16 %v587, %v583
        %v700 = vpack.c.b16 %v588, %v584
        %v701 = vpack.c.b16 %v589, %v585
        %v702 = vpack.c.b16 %v594, %v590
        %v703 = vpack.c.b16 %v595, %v591
        %v704 = vpack.c.b16 %v596, %v592
        %v705 = vpack.c.b16 %v597, %v593
        %v706 = vpack.c.b16 %v602, %v598
        %v707 = vpack.c.b16 %v603, %v599
        %v708 = vpack.c.b16 %v604, %v600
        %v709 = vpack.c.b16 %v605, %v601
        %v710 = vpack.c.b16 %v610, %v606
        %v711 = vpack.c.b16 %v611, %v607
        %v712 = vpack.c.b16 %v612, %v608
        %v713 = vpack.c.b16 %v613, %v609
        %v714 = vpack.c.b16 %v618, %v614
        %v715 = vpack.c.b16 %v619, %v615
        %v716 = vpack.c.b16 %v620, %v616
        %v717 = vpack.c.b16 %v621, %v617
        %v718 = vpack.c.b16 %v626, %v622
        %v719 = vpack.c.b16 %v627, %v623
        %v720 = vpack.c.b16 %v628, %v624
        %v721 = vpack.c.b16 %v629, %v625
        %v722 = vpack.c.b16 %v634, %v630
        %v723 = vpack.c.b16 %v635, %v631
        %v724 = vpack.c.b16 %v636, %v632
        %v725 = vpack.c.b16 %v637, %v633
        %v726 = vpack.c.b16 %v642, %v638
        %v727 = vpack.c.b16 %v643, %v639
        %v728 = vpack.c.b16 %v644, %v640
        %v729 = vpack.c.b16 %v645, %v641
        %v730 = vpack.c.b16 %v650, %v646
        %v731 = vpack.c.b16 %v651, %v647
        %v732 = vpack.c.b16 %v652, %v648
        %v733 = vpack.c.b16 %v653, %v649
        %v734 = vpack.c.b16 %v658, %v654
        %v735 = vpack.c.b16 %v659, %v655
        %v736 = vpack.c.b16 %v660, %v656
        %v737 = vpack.c.b16 %v661, %v657
        %v738 = vpack.c.b16 %v666, %v662
        %v739 = vpack.c.b16 %v667, %v663
        %v740 = vpack.c.b16 %v668, %v664
        %v741 = vpack.c.b16 %v669, %v665
        %v742 = vpack.c.b16 %v674, %v670
        %v743 = vpack.c.b16 %v675, %v671
        %v744 = vpack.c.b16 %v676, %v672
        %v745 = vpack.c.b16 %v677, %v673
        %v746 = vpack.c.b16 %v682, %v678
        %v747 = vpack.c.b16 %v683, %v679
        %v748 = vpack.c.b16 %v684, %v680
        %v749 = vpack.c.b16 %v685, %v681
        %814 = vmatprep.subr.bf16.mxu0 %v687
        %815 = vmatpush1.bf16.msra.mxu0 %v686
        %816 = vmatprep.subr.bf16.mxu0 %v691
        %817 = vmatpush1.bf16.msra.mxu0 %v690
        %818 = vmatprep.subr.bf16.mxu0 %v695
        %819 = vmatpush1.bf16.msra.mxu0 %v694
        %820 = vmatprep.subr.bf16.mxu0 %v699
        %821 = vmatpush1.bf16.msra.mxu0 %v698
        %822 = vmatprep.subr.bf16.mxu0 %v703
        %823 = vmatpush1.bf16.msra.mxu0 %v702
        %824 = vmatprep.subr.bf16.mxu0 %v707
        %825 = vmatpush1.bf16.msra.mxu0 %v706
        %826 = vmatprep.subr.bf16.mxu0 %v711
        %827 = vmatpush1.bf16.msra.mxu0 %v710
        %828 = vmatprep.subr.bf16.mxu0 %v715
        %829 = vmatpush1.bf16.msra.mxu0 %v714
        %830 = vmatprep.subr.bf16.mxu0 %v719
        %831 = vmatpush1.bf16.msra.mxu0 %v718
        %832 = vmatprep.subr.bf16.mxu0 %v723
        %833 = vmatpush1.bf16.msra.mxu0 %v722
        %834 = vmatprep.subr.bf16.mxu0 %v727
        %835 = vmatpush1.bf16.msra.mxu0 %v726
        %836 = vmatprep.subr.bf16.mxu0 %v731
        %837 = vmatpush1.bf16.msra.mxu0 %v730
        %838 = vmatprep.subr.bf16.mxu0 %v735
        %839 = vmatpush1.bf16.msra.mxu0 %v734
        %840 = vmatprep.subr.bf16.mxu0 %v739
        %841 = vmatpush1.bf16.msra.mxu0 %v738
        %842 = vmatprep.subr.bf16.mxu0 %v743
        %843 = vmatpush1.bf16.msra.mxu0 %v742
        %844 = vmatprep.subr.bf16.mxu0 %v747
        %845 = vmatpush1.bf16.msra.mxu0 %v746
        %846 = vmatprep.mubr.bf16.mxu0 %v365
        %847 = vmatmul.mubr.bf16.gmra.mrb[0].mxu0 %v364
        %v848 = vpop.f32.mrb[0].mxu0
        %v849 = vadd.f32 0.0, %v848
        %v850 = vpop.f32.mrb[0].mxu0
        %v851 = vadd.f32 0.0, %v850
        %v852 = vpop.f32.mrb[0].mxu0
        %v853 = vadd.f32 0.0, %v852
        %v854 = vpop.f32.mrb[0].mxu0
        %v855 = vadd.f32 0.0, %v854
        %856 = vdwg.mxu0
        %857 = vmatprep.subr.bf16.mxu0 %v689
        %858 = vmatpush1.bf16.msra.mxu0 %v688
        %859 = vmatprep.subr.bf16.mxu0 %v693
        %860 = vmatpush1.bf16.msra.mxu0 %v692
        %861 = vmatprep.subr.bf16.mxu0 %v697
        %862 = vmatpush1.bf16.msra.mxu0 %v696
        %863 = vmatprep.subr.bf16.mxu0 %v701
        %864 = vmatpush1.bf16.msra.mxu0 %v700
        %865 = vmatprep.subr.bf16.mxu0 %v705
        %866 = vmatpush1.bf16.msra.mxu0 %v704
        %867 = vmatprep.subr.bf16.mxu0 %v709
        %868 = vmatpush1.bf16.msra.mxu0 %v708
        %869 = vmatprep.subr.bf16.mxu0 %v713
        %870 = vmatpush1.bf16.msra.mxu0 %v712
        %871 = vmatprep.subr.bf16.mxu0 %v717
        %872 = vmatpush1.bf16.msra.mxu0 %v716
        %873 = vmatprep.subr.bf16.mxu0 %v721
        %874 = vmatpush1.bf16.msra.mxu0 %v720
        %875 = vmatprep.subr.bf16.mxu0 %v725
        %876 = vmatpush1.bf16.msra.mxu0 %v724
        %877 = vmatprep.subr.bf16.mxu0 %v729
        %878 = vmatpush1.bf16.msra.mxu0 %v728
        %879 = vmatprep.subr.bf16.mxu0 %v733
        %880 = vmatpush1.bf16.msra.mxu0 %v732
        %881 = vmatprep.subr.bf16.mxu0 %v737
        %882 = vmatpush1.bf16.msra.mxu0 %v736
        %883 = vmatprep.subr.bf16.mxu0 %v741
        %884 = vmatpush1.bf16.msra.mxu0 %v740
        %885 = vmatprep.subr.bf16.mxu0 %v745
        %886 = vmatpush1.bf16.msra.mxu0 %v744
        %887 = vmatprep.subr.bf16.mxu0 %v749
        %888 = vmatpush1.bf16.msra.mxu0 %v748
        %889 = vmatprep.mubr.bf16.mxu0 %v365
        %890 = vmatmul.mubr.bf16.gmra.mrb[0].mxu0 %v364
        %v891 = vpop.f32.mrb[0].mxu0
        %v892 = vadd.f32 0.0, %v891
        %v893 = vpop.f32.mrb[0].mxu0
        %v894 = vadd.f32 0.0, %v893
        %v895 = vpop.f32.mrb[0].mxu0
        %v896 = vadd.f32 0.0, %v895
        %v897 = vpop.f32.mrb[0].mxu0
        %v898 = vadd.f32 0.0, %v897
        %899 = vdwg.mxu0
        %v964 = vunpack.c.l.b16 %v366
        %v965 = vunpack.c.h.b16 %v366
        %v966 = vunpack.c.l.b16 %v367
        %v967 = vunpack.c.h.b16 %v367
        %v968 = vunpack.c.l.b16 %v368
        %v969 = vunpack.c.h.b16 %v368
        %v970 = vunpack.c.l.b16 %v369
        %v971 = vunpack.c.h.b16 %v369
        %v972 = vunpack.c.l.b16 %v370
        %v973 = vunpack.c.h.b16 %v370
        %v974 = vunpack.c.l.b16 %v371
        %v975 = vunpack.c.h.b16 %v371
        %v976 = vunpack.c.l.b16 %v372
        %v977 = vunpack.c.h.b16 %v372
        %v978 = vunpack.c.l.b16 %v373
        %v979 = vunpack.c.h.b16 %v373
        %v980 = vunpack.c.l.b16 %v374
        %v981 = vunpack.c.h.b16 %v374
        %v982 = vunpack.c.l.b16 %v375
        %v983 = vunpack.c.h.b16 %v375
        %v984 = vunpack.c.l.b16 %v376
        %v985 = vunpack.c.h.b16 %v376
        %v986 = vunpack.c.l.b16 %v377
        %v987 = vunpack.c.h.b16 %v377
        %v988 = vunpack.c.l.b16 %v378
        %v989 = vunpack.c.h.b16 %v378
        %v990 = vunpack.c.l.b16 %v379
        %v991 = vunpack.c.h.b16 %v379
        %v992 = vunpack.c.l.b16 %v380
        %v993 = vunpack.c.h.b16 %v380
        %v994 = vunpack.c.l.b16 %v381
        %v995 = vunpack.c.h.b16 %v381
        %v996 = vunpack.c.l.b16 %v382
        %v997 = vunpack.c.h.b16 %v382
        %v998 = vunpack.c.l.b16 %v383
        %v999 = vunpack.c.h.b16 %v383
        %v1000 = vunpack.c.l.b16 %v384
        %v1001 = vunpack.c.h.b16 %v384
        %v1002 = vunpack.c.l.b16 %v385
        %v1003 = vunpack.c.h.b16 %v385
        %v1004 = vunpack.c.l.b16 %v386
        %v1005 = vunpack.c.h.b16 %v386
        %v1006 = vunpack.c.l.b16 %v387
        %v1007 = vunpack.c.h.b16 %v387
        %v1008 = vunpack.c.l.b16 %v388
        %v1009 = vunpack.c.h.b16 %v388
        %v1010 = vunpack.c.l.b16 %v389
        %v1011 = vunpack.c.h.b16 %v389
        %v1012 = vunpack.c.l.b16 %v390
        %v1013 = vunpack.c.h.b16 %v390
        %v1014 = vunpack.c.l.b16 %v391
        %v1015 = vunpack.c.h.b16 %v391
        %v1016 = vunpack.c.l.b16 %v392
        %v1017 = vunpack.c.h.b16 %v392
        %v1018 = vunpack.c.l.b16 %v393
        %v1019 = vunpack.c.h.b16 %v393
        %v1020 = vunpack.c.l.b16 %v394
        %v1021 = vunpack.c.h.b16 %v394
        %v1022 = vunpack.c.l.b16 %v395
        %v1023 = vunpack.c.h.b16 %v395
        %v1024 = vunpack.c.l.b16 %v396
        %v1025 = vunpack.c.h.b16 %v396
        %v1026 = vunpack.c.l.b16 %v397
        %v1027 = vunpack.c.h.b16 %v397
        %v1028 = vunpack.c.l.b16 %v398
        %v1029 = vunpack.c.h.b16 %v398
        %v1030 = vunpack.c.l.b16 %v399
        %v1031 = vunpack.c.h.b16 %v399
        %v1032 = vunpack.c.l.b16 %v400
        %v1033 = vunpack.c.h.b16 %v400
        %v1034 = vunpack.c.l.b16 %v401
        %v1035 = vunpack.c.h.b16 %v401
        %v1036 = vunpack.c.l.b16 %v402
        %v1037 = vunpack.c.h.b16 %v402
        %v1038 = vunpack.c.l.b16 %v403
        %v1039 = vunpack.c.h.b16 %v403
        %v1040 = vunpack.c.l.b16 %v404
        %v1041 = vunpack.c.h.b16 %v404
        %v1042 = vunpack.c.l.b16 %v405
        %v1043 = vunpack.c.h.b16 %v405
        %v1044 = vunpack.c.l.b16 %v406
        %v1045 = vunpack.c.h.b16 %v406
        %v1046 = vunpack.c.l.b16 %v407
        %v1047 = vunpack.c.h.b16 %v407
        %v1048 = vunpack.c.l.b16 %v408
        %v1049 = vunpack.c.h.b16 %v408
        %v1050 = vunpack.c.l.b16 %v409
        %v1051 = vunpack.c.h.b16 %v409
        %v1052 = vunpack.c.l.b16 %v410
        %v1053 = vunpack.c.h.b16 %v410
        %v1054 = vunpack.c.l.b16 %v411
        %v1055 = vunpack.c.h.b16 %v411
        %v1056 = vunpack.c.l.b16 %v412
        %v1057 = vunpack.c.h.b16 %v412
        %v1058 = vunpack.c.l.b16 %v413
        %v1059 = vunpack.c.h.b16 %v413
        %v1060 = vunpack.c.l.b16 %v414
        %v1061 = vunpack.c.h.b16 %v414
        %v1062 = vunpack.c.l.b16 %v415
        %v1063 = vunpack.c.h.b16 %v415
        %v1064 = vunpack.c.l.b16 %v416
        %v1065 = vunpack.c.h.b16 %v416
        %v1066 = vunpack.c.l.b16 %v417
        %v1067 = vunpack.c.h.b16 %v417
        %v1068 = vunpack.c.l.b16 %v418
        %v1069 = vunpack.c.h.b16 %v418
        %v1070 = vunpack.c.l.b16 %v419
        %v1071 = vunpack.c.h.b16 %v419
        %v1072 = vunpack.c.l.b16 %v420
        %v1073 = vunpack.c.h.b16 %v420
        %v1074 = vunpack.c.l.b16 %v421
        %v1075 = vunpack.c.h.b16 %v421
        %v1076 = vunpack.c.l.b16 %v422
        %v1077 = vunpack.c.h.b16 %v422
        %v1078 = vunpack.c.l.b16 %v423
        %v1079 = vunpack.c.h.b16 %v423
        %v1080 = vunpack.c.l.b16 %v424
        %v1081 = vunpack.c.h.b16 %v424
        %v1082 = vunpack.c.l.b16 %v425
        %v1083 = vunpack.c.h.b16 %v425
        %v1084 = vunpack.c.l.b16 %v426
        %v1085 = vunpack.c.h.b16 %v426
        %v1086 = vunpack.c.l.b16 %v427
        %v1087 = vunpack.c.h.b16 %v427
        %v1088 = vunpack.c.l.b16 %v428
        %v1089 = vunpack.c.h.b16 %v428
        %v1090 = vunpack.c.l.b16 %v429
        %v1091 = vunpack.c.h.b16 %v429
        %v1092 = vpack.c.b16 %v968, %v964
        %v1093 = vpack.c.b16 %v969, %v965
        %v1094 = vpack.c.b16 %v970, %v966
        %v1095 = vpack.c.b16 %v971, %v967
        %v1096 = vpack.c.b16 %v976, %v972
        %v1097 = vpack.c.b16 %v977, %v973
        %v1098 = vpack.c.b16 %v978, %v974
        %v1099 = vpack.c.b16 %v979, %v975
        %v1100 = vpack.c.b16 %v984, %v980
        %v1101 = vpack.c.b16 %v985, %v981
        %v1102 = vpack.c.b16 %v986, %v982
        %v1103 = vpack.c.b16 %v987, %v983
        %v1104 = vpack.c.b16 %v992, %v988
        %v1105 = vpack.c.b16 %v993, %v989
        %v1106 = vpack.c.b16 %v994, %v990
        %v1107 = vpack.c.b16 %v995, %v991
        %v1108 = vpack.c.b16 %v1000, %v996
        %v1109 = vpack.c.b16 %v1001, %v997
        %v1110 = vpack.c.b16 %v1002, %v998
        %v1111 = vpack.c.b16 %v1003, %v999
        %v1112 = vpack.c.b16 %v1008, %v1004
        %v1113 = vpack.c.b16 %v1009, %v1005
        %v1114 = vpack.c.b16 %v1010, %v1006
        %v1115 = vpack.c.b16 %v1011, %v1007
        %v1116 = vpack.c.b16 %v1016, %v1012
        %v1117 = vpack.c.b16 %v1017, %v1013
        %v1118 = vpack.c.b16 %v1018, %v1014
        %v1119 = vpack.c.b16 %v1019, %v1015
        %v1120 = vpack.c.b16 %v1024, %v1020
        %v1121 = vpack.c.b16 %v1025, %v1021
        %v1122 = vpack.c.b16 %v1026, %v1022
        %v1123 = vpack.c.b16 %v1027, %v1023
        %v1124 = vpack.c.b16 %v1032, %v1028
        %v1125 = vpack.c.b16 %v1033, %v1029
        %v1126 = vpack.c.b16 %v1034, %v1030
        %v1127 = vpack.c.b16 %v1035, %v1031
        %v1128 = vpack.c.b16 %v1040, %v1036
        %v1129 = vpack.c.b16 %v1041, %v1037
        %v1130 = vpack.c.b16 %v1042, %v1038
        %v1131 = vpack.c.b16 %v1043, %v1039
        %v1132 = vpack.c.b16 %v1048, %v1044
        %v1133 = vpack.c.b16 %v1049, %v1045
        %v1134 = vpack.c.b16 %v1050, %v1046
        %v1135 = vpack.c.b16 %v1051, %v1047
        %v1136 = vpack.c.b16 %v1056, %v1052
        %v1137 = vpack.c.b16 %v1057, %v1053
        %v1138 = vpack.c.b16 %v1058, %v1054
        %v1139 = vpack.c.b16 %v1059, %v1055
        %v1140 = vpack.c.b16 %v1064, %v1060
        %v1141 = vpack.c.b16 %v1065, %v1061
        %v1142 = vpack.c.b16 %v1066, %v1062
        %v1143 = vpack.c.b16 %v1067, %v1063
        %v1144 = vpack.c.b16 %v1072, %v1068
        %v1145 = vpack.c.b16 %v1073, %v1069
        %v1146 = vpack.c.b16 %v1074, %v1070
        %v1147 = vpack.c.b16 %v1075, %v1071
        %v1148 = vpack.c.b16 %v1080, %v1076
        %v1149 = vpack.c.b16 %v1081, %v1077
        %v1150 = vpack.c.b16 %v1082, %v1078
        %v1151 = vpack.c.b16 %v1083, %v1079
        %v1152 = vpack.c.b16 %v1088, %v1084
        %v1153 = vpack.c.b16 %v1089, %v1085
        %v1154 = vpack.c.b16 %v1090, %v1086
        %v1155 = vpack.c.b16 %v1091, %v1087
        %1220 = vmatprep.subr.bf16.mxu0 %v1093
        %1221 = vmatpush1.bf16.msra.mxu0 %v1092
        %1222 = vmatprep.subr.bf16.mxu0 %v1097
        %1223 = vmatpush1.bf16.msra.mxu0 %v1096
        %1224 = vmatprep.subr.bf16.mxu0 %v1101
        %1225 = vmatpush1.bf16.msra.mxu0 %v1100
        %1226 = vmatprep.subr.bf16.mxu0 %v1105
        %1227 = vmatpush1.bf16.msra.mxu0 %v1104
        %1228 = vmatprep.subr.bf16.mxu0 %v1109
        %1229 = vmatpush1.bf16.msra.mxu0 %v1108
        %1230 = vmatprep.subr.bf16.mxu0 %v1113
        %1231 = vmatpush1.bf16.msra.mxu0 %v1112
        %1232 = vmatprep.subr.bf16.mxu0 %v1117
        %1233 = vmatpush1.bf16.msra.mxu0 %v1116
        %1234 = vmatprep.subr.bf16.mxu0 %v1121
        %1235 = vmatpush1.bf16.msra.mxu0 %v1120
        %1236 = vmatprep.subr.bf16.mxu0 %v1125
        %1237 = vmatpush1.bf16.msra.mxu0 %v1124
        %1238 = vmatprep.subr.bf16.mxu0 %v1129
        %1239 = vmatpush1.bf16.msra.mxu0 %v1128
        %1240 = vmatprep.subr.bf16.mxu0 %v1133
        %1241 = vmatpush1.bf16.msra.mxu0 %v1132
        %1242 = vmatprep.subr.bf16.mxu0 %v1137
        %1243 = vmatpush1.bf16.msra.mxu0 %v1136
        %1244 = vmatprep.subr.bf16.mxu0 %v1141
        %1245 = vmatpush1.bf16.msra.mxu0 %v1140
        %1246 = vmatprep.subr.bf16.mxu0 %v1145
        %1247 = vmatpush1.bf16.msra.mxu0 %v1144
        %1248 = vmatprep.subr.bf16.mxu0 %v1149
        %1249 = vmatpush1.bf16.msra.mxu0 %v1148
        %1250 = vmatprep.subr.bf16.mxu0 %v1153
        %1251 = vmatpush1.bf16.msra.mxu0 %v1152
        %1252 = vmatprep.mubr.bf16.mxu0 %v359
        %1253 = vmatmul.mubr.bf16.gmra.mrb[0].mxu0 %v358
        %v1254 = vpop.f32.mrb[0].mxu0
        %v1255 = vadd.f32 %v849, %v1254
        %v1256 = vpop.f32.mrb[0].mxu0
        %v1257 = vadd.f32 %v851, %v1256
        %v1258 = vpop.f32.mrb[0].mxu0
        %v1259 = vadd.f32 %v853, %v1258
        %v1260 = vpop.f32.mrb[0].mxu0
        %v1261 = vadd.f32 %v855, %v1260
        %1262 = vdwg.mxu0
        %1263 = vmatprep.subr.bf16.mxu0 %v1095
        %1264 = vmatpush1.bf16.msra.mxu0 %v1094
        %1265 = vmatprep.subr.bf16.mxu0 %v1099
        %1266 = vmatpush1.bf16.msra.mxu0 %v1098
        %1267 = vmatprep.subr.bf16.mxu0 %v1103
        %1268 = vmatpush1.bf16.msra.mxu0 %v1102
        %1269 = vmatprep.subr.bf16.mxu0 %v1107
        %1270 = vmatpush1.bf16.msra.mxu0 %v1106
        %1271 = vmatprep.subr.bf16.mxu0 %v1111
        %1272 = vmatpush1.bf16.msra.mxu0 %v1110
        %1273 = vmatprep.subr.bf16.mxu0 %v1115
        %1274 = vmatpush1.bf16.msra.mxu0 %v1114
        %1275 = vmatprep.subr.bf16.mxu0 %v1119
        %1276 = vmatpush1.bf16.msra.mxu0 %v1118
        %1277 = vmatprep.subr.bf16.mxu0 %v1123
        %1278 = vmatpush1.bf16.msra.mxu0 %v1122
        %1279 = vmatprep.subr.bf16.mxu0 %v1127
        %1280 = vmatpush1.bf16.msra.mxu0 %v1126
        %1281 = vmatprep.subr.bf16.mxu0 %v1131
        %1282 = vmatpush1.bf16.msra.mxu0 %v1130
        %1283 = vmatprep.subr.bf16.mxu0 %v1135
        %1284 = vmatpush1.bf16.msra.mxu0 %v1134
        %1285 = vmatprep.subr.bf16.mxu0 %v1139
        %1286 = vmatpush1.bf16.msra.mxu0 %v1138
        %1287 = vmatprep.subr.bf16.mxu0 %v1143
        %1288 = vmatpush1.bf16.msra.mxu0 %v1142
        %1289 = vmatprep.subr.bf16.mxu0 %v1147
        %1290 = vmatpush1.bf16.msra.mxu0 %v1146
        %1291 = vmatprep.subr.bf16.mxu0 %v1151
        %1292 = vmatpush1.bf16.msra.mxu0 %v1150
        %1293 = vmatprep.subr.bf16.mxu0 %v1155
        %1294 = vmatpush1.bf16.msra.mxu0 %v1154
        %1295 = vmatprep.mubr.bf16.mxu0 %v359
        %1296 = vmatmul.mubr.bf16.gmra.mrb[0].mxu0 %v358
        %v1297 = vpop.f32.mrb[0].mxu0
        %v1298 = vadd.f32 %v892, %v1297
        %v1299 = vpop.f32.mrb[0].mxu0
        %v1300 = vadd.f32 %v894, %v1299
        %v1301 = vpop.f32.mrb[0].mxu0
        %v1302 = vadd.f32 %v896, %v1301
        %v1303 = vpop.f32.mrb[0].mxu0
        %v1304 = vadd.f32 %v898, %v1303
        %1305 = vdwg.mxu0
        %v1306 = vmul.f32 %v1255, %v1255
        %v1307 = vmul.f32 %v1257, %v1257
        %v1308 = vmul.f32 %v1259, %v1259
        %v1309 = vmul.f32 %v1261, %v1261
        %v1310 = vmul.f32 %v1298, %v1298
        %v1311 = vmul.f32 %v1300, %v1300
        %v1312 = vmul.f32 %v1302, %v1302
        %v1313 = vmul.f32 %v1304, %v1304
        %v1314 = vadd.f32 %v1306, %v1310
        %v1315 = vadd.f32 %v1307, %v1311
        %v1316 = vadd.f32 %v1308, %v1312
        %v1317 = vadd.f32 %v1309, %v1313
        %v1318 = vrsqrt.pop %v1314
        %v1319 = vmul.f32 %v1314, %v1318
        %vm1320 = vcmp.eq.f32.partialorder %v1314, inf
        %v1321 = vsel %vm1320, %v1314, %v1319
        %vm1322 = vcmp.eq.f32.partialorder %v1314, 0.0
        %v1323 = vand.u32 %v1314, 2147483648
        %v1324 = vsel %vm1322, %v1323, %v1321
        %v1325 = vrsqrt.pop %v1315
        %v1326 = vmul.f32 %v1315, %v1325
        %vm1327 = vcmp.eq.f32.partialorder %v1315, inf
        %v1328 = vsel %vm1327, %v1315, %v1326
        %vm1329 = vcmp.eq.f32.partialorder %v1315, 0.0
        %v1330 = vand.u32 %v1315, 2147483648
        %v1331 = vsel %vm1329, %v1330, %v1328
        %v1332 = vrsqrt.pop %v1316
        %v1333 = vmul.f32 %v1316, %v1332
        %vm1334 = vcmp.eq.f32.partialorder %v1316, inf
        %v1335 = vsel %vm1334, %v1316, %v1333
        %vm1336 = vcmp.eq.f32.partialorder %v1316, 0.0
        %v1337 = vand.u32 %v1316, 2147483648
        %v1338 = vsel %vm1336, %v1337, %v1335
        %v1339 = vrsqrt.pop %v1317
        %v1340 = vmul.f32 %v1317, %v1339
        %vm1341 = vcmp.eq.f32.partialorder %v1317, inf
        %v1342 = vsel %vm1341, %v1317, %v1340
        %vm1343 = vcmp.eq.f32.partialorder %v1317, 0.0
        %v1344 = vand.u32 %v1317, 2147483648
        %v1345 = vsel %vm1343, %v1344, %v1342
        %v1346 = vpack.c.bf16 %v1338, %v1324
        %v1347 = vpack.c.bf16 %v1345, %v1331
        %v1348 = vld [vmem:[#allocation10] sm:$0xf]
        %v1349 = vld [vmem:[#allocation10 + $0x4] sm:$0xf]
        %v1350 = vld [vmem:[#allocation10 + $0x8] sm:$0xf]
        %v1351 = vld [vmem:[#allocation10 + $0xc] sm:$0xf]
        %v1352 = vld [vmem:[#allocation10 + $0x10] sm:$0xf]
        %v1353 = vld [vmem:[#allocation10 + $0x14] sm:$0xf]
        %v1354 = vld [vmem:[#allocation10 + $0x18] sm:$0xf]
        %v1355 = vld [vmem:[#allocation10 + $0x1c] sm:$0xf]
        %v1356 = vld [vmem:[#allocation10 + $0x20] sm:$0xf]
        %v1357 = vld [vmem:[#allocation10 + $0x24] sm:$0xf]
        %v1358 = vld [vmem:[#allocation10 + $0x28] sm:$0xf]
        %v1359 = vld [vmem:[#allocation10 + $0x2c] sm:$0xf]
        %v1360 = vld [vmem:[#allocation10 + $0x30] sm:$0xf]
        %v1361 = vld [vmem:[#allocation10 + $0x34] sm:$0xf]
        %v1362 = vld [vmem:[#allocation10 + $0x38] sm:$0xf]
        %v1363 = vld [vmem:[#allocation10 + $0x3c] sm:$0xf]
        %v1364 = vld [vmem:[#allocation10 + $0x40] sm:$0xf]
        %v1365 = vld [vmem:[#allocation10 + $0x44] sm:$0xf]
        %v1366 = vld [vmem:[#allocation10 + $0x48] sm:$0xf]
        %v1367 = vld [vmem:[#allocation10 + $0x4c] sm:$0xf]
        %v1368 = vld [vmem:[#allocation10 + $0x50] sm:$0xf]
        %v1369 = vld [vmem:[#allocation10 + $0x54] sm:$0xf]
        %v1370 = vld [vmem:[#allocation10 + $0x58] sm:$0xf]
        %v1371 = vld [vmem:[#allocation10 + $0x5c] sm:$0xf]
        %v1372 = vld [vmem:[#allocation10 + $0x60] sm:$0xf]
        %v1373 = vld [vmem:[#allocation10 + $0x64] sm:$0xf]
        %v1374 = vld [vmem:[#allocation10 + $0x68] sm:$0xf]
        %v1375 = vld [vmem:[#allocation10 + $0x6c] sm:$0xf]
        %v1376 = vld [vmem:[#allocation10 + $0x70] sm:$0xf]
        %v1377 = vld [vmem:[#allocation10 + $0x74] sm:$0xf]
        %v1378 = vld [vmem:[#allocation10 + $0x78] sm:$0xf]
        %v1379 = vld [vmem:[#allocation10 + $0x7c] sm:$0xf]
        %v1412 = vunpack.c.l.b16 %v1348
        %v1413 = vunpack.c.l.b16 %v1349
        %v1414 = vunpack.c.l.b16 %v1350
        %v1415 = vunpack.c.l.b16 %v1351
        %v1416 = vunpack.c.l.b16 %v1352
        %v1417 = vunpack.c.l.b16 %v1353
        %v1418 = vunpack.c.l.b16 %v1354
        %v1419 = vunpack.c.l.b16 %v1355
        %v1420 = vunpack.c.l.b16 %v1356
        %v1421 = vunpack.c.l.b16 %v1357
        %v1422 = vunpack.c.l.b16 %v1358
        %v1423 = vunpack.c.l.b16 %v1359
        %v1424 = vunpack.c.l.b16 %v1360
        %v1425 = vunpack.c.l.b16 %v1361
        %v1426 = vunpack.c.l.b16 %v1362
        %v1427 = vunpack.c.l.b16 %v1363
        %v1428 = vunpack.c.l.b16 %v1364
        %v1429 = vunpack.c.l.b16 %v1365
        %v1430 = vunpack.c.l.b16 %v1366
        %v1431 = vunpack.c.l.b16 %v1367
        %v1432 = vunpack.c.l.b16 %v1368
        %v1433 = vunpack.c.l.b16 %v1369
        %v1434 = vunpack.c.l.b16 %v1370
        %v1435 = vunpack.c.l.b16 %v1371
        %v1436 = vunpack.c.l.b16 %v1372
        %v1437 = vunpack.c.l.b16 %v1373
        %v1438 = vunpack.c.l.b16 %v1374
        %v1439 = vunpack.c.l.b16 %v1375
        %v1440 = vunpack.c.l.b16 %v1376
        %v1441 = vunpack.c.l.b16 %v1377
        %v1442 = vunpack.c.l.b16 %v1378
        %v1443 = vunpack.c.l.b16 %v1379
        %v1444 = vpack.c.b16 %v1413, %v1412
        %v1445 = vpack.c.b16 %v1415, %v1414
        %v1446 = vpack.c.b16 %v1417, %v1416
        %v1447 = vpack.c.b16 %v1419, %v1418
        %v1448 = vpack.c.b16 %v1421, %v1420
        %v1449 = vpack.c.b16 %v1423, %v1422
        %v1450 = vpack.c.b16 %v1425, %v1424
        %v1451 = vpack.c.b16 %v1427, %v1426
        %v1452 = vpack.c.b16 %v1429, %v1428
        %v1453 = vpack.c.b16 %v1431, %v1430
        %v1454 = vpack.c.b16 %v1433, %v1432
        %v1455 = vpack.c.b16 %v1435, %v1434
        %v1456 = vpack.c.b16 %v1437, %v1436
        %v1457 = vpack.c.b16 %v1439, %v1438
        %v1458 = vpack.c.b16 %v1441, %v1440
        %v1459 = vpack.c.b16 %v1443, %v1442
        %1476 = vmatprep.subr.bf16.mxu0 0
        %1477 = vmatpush1.bf16.msra.mxu0 %v1444
        %1478 = vmatprep.subr.bf16.mxu0 0
        %1479 = vmatpush1.bf16.msra.mxu0 %v1445
        %1480 = vmatprep.subr.bf16.mxu0 0
        %1481 = vmatpush1.bf16.msra.mxu0 %v1446
        %1482 = vmatprep.subr.bf16.mxu0 0
        %1483 = vmatpush1.bf16.msra.mxu0 %v1447
        %1484 = vmatprep.subr.bf16.mxu0 0
        %1485 = vmatpush1.bf16.msra.mxu0 %v1448
        %1486 = vmatprep.subr.bf16.mxu0 0
        %1487 = vmatpush1.bf16.msra.mxu0 %v1449
        %1488 = vmatprep.subr.bf16.mxu0 0
        %1489 = vmatpush1.bf16.msra.mxu0 %v1450
        %1490 = vmatprep.subr.bf16.mxu0 0
        %1491 = vmatpush1.bf16.msra.mxu0 %v1451
        %1492 = vmatprep.subr.bf16.mxu0 0
        %1493 = vmatpush1.bf16.msra.mxu0 %v1452
        %1494 = vmatprep.subr.bf16.mxu0 0
        %1495 = vmatpush1.bf16.msra.mxu0 %v1453
        %1496 = vmatprep.subr.bf16.mxu0 0
        %1497 = vmatpush1.bf16.msra.mxu0 %v1454
        %1498 = vmatprep.subr.bf16.mxu0 0
        %1499 = vmatpush1.bf16.msra.mxu0 %v1455
        %1500 = vmatprep.subr.bf16.mxu0 0
        %1501 = vmatpush1.bf16.msra.mxu0 %v1456
        %1502 = vmatprep.subr.bf16.mxu0 0
        %1503 = vmatpush1.bf16.msra.mxu0 %v1457
        %1504 = vmatprep.subr.bf16.mxu0 0
        %1505 = vmatpush1.bf16.msra.mxu0 %v1458
        %1506 = vmatprep.subr.bf16.mxu0 0
        %1507 = vmatpush1.bf16.msra.mxu0 %v1459
        %1508 = vmatprep.mubr.bf16.mxu0 %v1347
        %1509 = vmatmul.mubr.bf16.gmra.mrb[0].mxu0 %v1346
        %v1510 = vpop.f32.mrb[0].mxu0
        %v1511 = vadd.f32 0.0, %v1510
        %v1512 = vpop.f32.mrb[0].mxu0
        %v1513 = vpop.f32.mrb[0].mxu0
        %v1514 = vadd.f32 0.0, %v1513
        %v1515 = vpop.f32.mrb[0].mxu0
        %1516 = vdwg.mxu0
        %v1517 = vmax.f32 %v1511, 1e-05
        %v1518 = vmax.f32 %v1514, 1e-05
        %v1519 = vlog2.pop %v1517
        %v1520 = vmul.f32 %v1519, 0.6931472
        %v1521 = vlog2.pop %v1518
        %v1522 = vmul.f32 %v1521, 0.6931472
        %v1523 = vsub.f32 %v1520, -11.512925
        %v1524 = vsub.f32 %v1522, -11.512925
        %v1525 = vrcp.pop 11.512925
        %v1526 = vmul.f32 %v1523, %v1525
        %v1527 = vmul.f32 %v1524, %v1525
        %1528 = vst [vmem:[%s349] sm:$0xff] %v1526
        %1529 = vst [vmem:[%s349 + $0x8] sm:$0xff] %v1527
        %s1530 = sand.u32 %s167, 1
        %s1531 = scalar_lea.sflag [#allocation4], %s1530
        %s1532 = sand.u32 %s167, 1
        %s1533 = smul.addr %s1532, 16
        %s1534 = scalar_lea.vmem [#allocation11], %s1533
        // Predicated region
        $region61: #{tpu_custom_call.1} parent=39 // pred_check
          %p1535 = pneg %p177
        $region62: #{tpu_custom_call.1} parent=39 // pred_check_branch
          %1537 = sbr.rel (%p1535) target = $region64
        $region63: #{tpu_custom_call.1} parent=39 // pred_region
          %s1538 = smul.u32 2, %s31
          %s1540 = ssub.s32 256, 256
          %1541 = vsyncadd %s1531, %s1540
          %s1542 = smul.addr %s30, 2
          %s1543 = sadd.s32 %s1538, %s1542
          %s1544 = smul.addr %s1543, 128
          %s1545 = scalar_lea.hbm %s5, %s1544
          %s1546 = sshll.u32 %s1534, 4
          %s1547 = int_to_ptr.vmem [resolvable:$true] %s1546
          %1552 = dma.vmem_to_hbm [thread:$0]  %s1547, 256, %s1545, %s1531, 128, 128, 8
        $region64: #{tpu_custom_call.1} parent=39 // pred_fallthru
          _
      $region40: #{tpu_custom_call.1} parent=5 // pred_fallthru
        _
      %p1553 = scmp.le.s32.totalorder 2, %s21
      // Predicated region
      $region65: #{tpu_custom_call.1} parent=5 // pred_check
        %p1554 = pneg %p1553
      $region66: #{tpu_custom_call.1} parent=5 // pred_check_branch
        %1556 = sbr.rel (%p1554) target = $region68
      $region67: #{tpu_custom_call.1} parent=5 // pred_region
        %s1557 = ssub.s32 %s21, 2
        // Predicated region
        $region69: #{tpu_custom_call.1} parent=67 // pred_check
          %p1558 = pneg %p183
        $region70: #{tpu_custom_call.1} parent=67 // pred_check_branch
          %1560 = sbr.rel (%p1558) target = $region72
        $region71: #{tpu_custom_call.1} parent=67 // pred_region
          %s1561 = sand.u32 %s168, 1
          %s1562 = scalar_lea.sflag [#allocation4], %s1561
          %s1563 = sand.u32 %s168, 1
          %s1564 = smul.addr %s1563, 16
          %s1565 = scalar_lea.vmem [#allocation11], %s1564
          %1566 = dma.done %s1562, 256
        $region72: #{tpu_custom_call.1} parent=67 // pred_fallthru
          _
      $region68: #{tpu_custom_call.1} parent=5 // pred_fallthru
        _
    $region6: #{tpu_custom_call.1} parent=1 // loop_footer
      %s25 = sadd.s32 1, %s21
    $region7: #{tpu_custom_call.1} parent=1 // loop_footer_branch
      %20 = sbr.rel target = $region3
    $region8: #{tpu_custom_call.1} parent=1 // loop_exit
      _
    %1567 = vsyncpa [#allocation3], 1
    %s1568 = scalar_lea.sflag [#allocation3], 1
    %1569 = vsyncpa %s1568, 1
    %1570 = vsyncpa [#allocation6], 1
    %s1571 = scalar_lea.sflag [#allocation6], 1
    %1572 = vsyncpa %s1571, 1
    %1573 = vsyncpa [#allocation9], 1
    %1574 = vsyncpa [#allocation4], 1
    %s1575 = scalar_lea.sflag [#allocation4], 1
    %1576 = vsyncpa %s1575, 1

</llo_original>
